<compile_context>
chip_gen: v5e
topology: v5e:2x2
jax: 0.10.0
libtpu: 0.0.40
codegen_flags: <defaults>
</compile_context>

<pallas_src>
import numpy as np
import jax
import jax.numpy as jnp
from jax.experimental import pallas as pl
from jax.experimental.pallas import tpu as pltpu


def _round_up(x, m):
    return (x + m - 1) // m * m


def _cdiv(a, b):
    return (a + b - 1) // b


# --------------------------------------------------------------------------- #
# Kernel
# --------------------------------------------------------------------------- #
def _spmv_cost_kernel(z_ref, mask_ref, lhs_ref, p_ref, acc_ref):
    """One (TR, CHBA_pad) row-tile: masked softmax + one-MXU-dot reduction."""
    b = pl.program_id(1)                      # row-block index (reduction axis)

    # Row-max-stabilized softmax over the lane-dense CH*BA axis.
    z = z_ref[...]                            # (TR, CHBA_pad) f32
    zmax = jnp.max(z, axis=1, keepdims=True)
    e = jnp.exp(z - zmax)                     # padded lanes (-1e30) -> exactly 0
    denom = jnp.sum(e, axis=1, keepdims=True)
    scale = mask_ref[...] / denom             # (TR, 1); empty/padded rows -> 0
    p = e * scale
    p_ref[...] = p                            # unmasked, lane-dense store

    # Resident (8, CHBA_pad) accumulator per shard; init at first row-block.
    @pl.when(b == 0)
    def _init():
        acc_ref[...] = jnp.zeros_like(acc_ref)

    # One MXU matmul does both reductions:
    #   lhs row 0 = nnz[r] -> sum_r nnz[r] * P[r, :]   (nnz_ch_ba partial)
    #   lhs row 1 = 1      -> sum_r P[r, :]            (column-sum partial)
    acc_ref[...] += jnp.dot(lhs_ref[...], p, preferred_element_type=jnp.float32)


# --------------------------------------------------------------------------- #
# Chip-aware planning helpers
# --------------------------------------------------------------------------- #
def _vmem_plan():
    """Chip-aware scoped-VMEM limit and kernel tiling budget (bytes)."""
    cap = None
    try:
        info = pltpu.get_tpu_info()
        cap = getattr(info, "vmem_capacity_bytes", None)
    except Exception:
        cap = None
    if not cap:
        cap = 64 * 1024 * 1024                 # conservative: v7x per-TC VMEM
    vmem_limit = min(max(cap // 2, 32 * 1024 * 1024), 100 * 1024 * 1024)
    budget = (vmem_limit * 3) // 4             # headroom for compiler scratch
    return int(vmem_limit), int(budget)


def _num_tensorcores():
    """Best-effort TensorCore count of the local device (1 on v5e/v6e/CPU)."""
    try:
        dev = jax.devices()[0]
        for attr in ("num_cores", "core_count"):
            v = getattr(dev, attr, None)
            if isinstance(v, int) and v > 0:
                return min(int(v), 2)
    except Exception:
        pass
    return 1


def _choose_tiling(R, CHBA_pad, tile_rows, num_shards, vmem_budget, n_cores):
    """Pick row tile TR, shard count NS, blocks-per-shard and padded rows."""
    R8 = _round_up(max(R, 8), 8)
    if tile_rows is None:
        # Per-row VMEM bytes: z (2 bufs) + P (2 bufs) + ~3 live full-width f32
        # temporaries, plus the lane-padded (TR,1) mask and (8,TR) lhs blocks.
        per_row = 4 * CHBA_pad * 7 + 4 * 128 * 2 + 4 * 8 * 2
        tile_rows = max(128, min(2048, vmem_budget // max(per_row, 1)))
    tile_rows = int(tile_rows)
    if tile_rows >= R8:
        tile_rows, blocks = R8, 1              # single block covers all rows
    else:
        # Multi-block: TR must be lane-aligned (128) for the (8, TR) lhs block.
        tile_rows = max(128, (tile_rows // 128) * 128)
        blocks = _cdiv(R, tile_rows)
    if num_shards is None:
        num_shards = n_cores if blocks >= 2 * n_cores else 1
    num_shards = max(1, min(int(num_shards), blocks))
    blocks = _round_up(blocks, num_shards)
    return tile_rows, num_shards, blocks // num_shards, blocks * tile_rows


# --------------------------------------------------------------------------- #
# Wrapper (forward pass)
# --------------------------------------------------------------------------- #
def grad_row_forward(i, W, D, CH, BA, seed, *, tile_rows=None, num_shards=None):
    """Matches grad_row_no_register_size_model.forward(i) in training mode."""
    R, C = D.shape
    CHBA = CH * BA
    assert W.shape == (R, CHBA)

    # temp is computed but unused: GumbelSoftmax.forward hard-codes temperature=1.
    _temp = 1000.0 - 999.0 / 9999.0 * i  # noqa: F841

    nnz = jnp.sum(D.astype(jnp.float32), axis=1)            # (R,)
    mask = (nnz != 0.0).astype(jnp.float32)                 # (R,)

    # Gumbel(0,1) noise, same formula as torch's sample_gumbel_like; fused with
    # the W add in XLA so the kernel streams the logits z exactly once.
    # TODO(synk): torch's exact uniform_ RNG stream is not reproduced; the JAX
    # PRNG draws a distributionally identical Gumbel(0,1) sample.
    eps = jnp.float32(1e-10)
    u = jax.random.uniform(jax.random.PRNGKey(int(seed)), (R, CHBA),
                           dtype=jnp.float32)
    gumbel = -jnp.log(eps - jnp.log(u + eps))
    z = W.astype(jnp.float32) + gumbel                      # (R, CHBA)

    # Lane-dense padding: CH*BA -> multiple of 128 (padded logits = -1e30 carry
    # zero probability mass); rows -> multiple of the chosen row tile.
    CHBA_pad = _round_up(CHBA, 128)
    vmem_limit, budget = _vmem_plan()
    n_cores = _num_tensorcores()
    TR, NS, BPS, R_pad = _choose_tiling(R, CHBA_pad, tile_rows, num_shards,
                                        budget, n_cores)

    if CHBA_pad != CHBA:
        z = jnp.pad(z, ((0, 0), (0, CHBA_pad - CHBA)), constant_values=-1e30)
    mask2d = mask.reshape(R, 1)
    if R_pad != R:
        z = jnp.pad(z, ((0, R_pad - R), (0, 0)))             # padded rows: z = 0
        mask2d = jnp.pad(mask2d, ((0, R_pad - R), (0, 0)))   # padded rows: mask 0

    # (8, R_pad) MXU lhs: row0 = nnz, row1 = 1 for real rows, rest zero.
    lhs = jnp.zeros((8, R_pad), jnp.float32)
    lhs = lhs.at[0, :R].set(nnz)
    lhs = lhs.at[1, :R].set(1.0)

    p_pad, acc_part = pl.pallas_call(
        _spmv_cost_kernel,
        grid=(NS, BPS),
        in_specs=[
            pl.BlockSpec((TR, CHBA_pad), lambda s, b: (s * BPS + b, 0)),
            pl.BlockSpec((TR, 1), lambda s, b: (s * BPS + b, 0)),
            pl.BlockSpec((8, TR), lambda s, b: (0, s * BPS + b)),
        ],
        out_specs=[
            pl.BlockSpec((TR, CHBA_pad), lambda s, b: (s * BPS + b, 0)),
            pl.BlockSpec((8, CHBA_pad), lambda s, b: (s, 0)),
        ],
        out_shape=(
            jax.ShapeDtypeStruct((R_pad, CHBA_pad), jnp.float32),   # P slab
            jax.ShapeDtypeStruct((NS * 8, CHBA_pad), jnp.float32),  # partials
        ),
        compiler_params=pltpu.CompilerParams(
            dimension_semantics=("parallel", "arbitrary"),
            vmem_limit_bytes=vmem_limit,
        ),
    )(z, mask2d, lhs)

    # Tiny O(CH*BA) epilogue in XLA (kept off the kernel's store path).
    P = p_pad[:R, :CHBA].reshape(R, CH, BA)
    acc = acc_part.reshape(NS, 8, CHBA_pad).sum(axis=0)      # combine shards
    nnz_ch_ba = acc[0, :CHBA].reshape(CH, BA)
    num_row_ch = acc[1, :CHBA].reshape(CH, BA).sum(axis=1)
    max_nnz_ch = jnp.max(nnz_ch_ba, axis=1)
    tot_max_nnz_ch = max_nnz_ch
    num_col_ch = jnp.full((CH,), float(C), dtype=jnp.float32)
    cost_ch = tot_max_nnz_ch + num_col_ch + num_row_ch
    max_cost = jnp.max(cost_ch)
    return (P, max_cost, cost_ch, max_nnz_ch, nnz_ch_ba,
            num_col_ch, num_row_ch, tot_max_nnz_ch)


# --------------------------------------------------------------------------- #
# Reference check
# --------------------------------------------------------------------------- #
def _reference_check(outs, D, C, CH, BA):
    """Validate softmax/mask properties of P and rebuild every reduction from
    the kernel's own P (the noise stream differs from torch, so an external
    redraw cannot match bitwise)."""
    (P, max_cost, cost_ch, max_nnz_ch, nnz_ch_ba,
     num_col_ch, num_row_ch, tot_max_nnz_ch) = outs
    P = np.asarray(P, dtype=np.float64)
    Dn = np.asarray(D, dtype=np.float64)
    R = Dn.shape[0]

    nnz = Dn.sum(axis=1)
    mask = (nnz != 0).astype(np.float64)
    # every non-empty row is a probability distribution; empty rows are zero
    np.testing.assert_allclose(P.reshape(R, -1).sum(axis=1), mask,
                               rtol=1e-5, atol=1e-5)
    assert (P >= 0.0).all() and (P <= 1.0 + 1e-6).all()

    x = P.reshape(R, 1, CH, BA) * Dn.reshape(R, C, 1, 1)
    nnz_ch_ba_ref = x.sum(axis=(0, 1))
    max_nnz_ch_ref = nnz_ch_ba_ref.max(axis=1)
    num_row_ch_ref = P.sum(axis=(0, 2))
    cost_ch_ref = max_nnz_ch_ref + C + num_row_ch_ref

    np.testing.assert_allclose(np.asarray(nnz_ch_ba), nnz_ch_ba_ref,
                               rtol=1e-4, atol=1e-4)
    np.testing.assert_allclose(np.asarray(max_nnz_ch), max_nnz_ch_ref,
                               rtol=1e-4, atol=1e-4)
    np.testing.assert_allclose(np.asarray(tot_max_nnz_ch), max_nnz_ch_ref,
                               rtol=1e-4, atol=1e-4)
    np.testing.assert_allclose(np.asarray(num_row_ch), num_row_ch_ref,
                               rtol=1e-4, atol=1e-4)
    np.testing.assert_allclose(np.asarray(cost_ch), cost_ch_ref,
                               rtol=1e-4, atol=1e-4)
    np.testing.assert_allclose(float(max_cost), cost_ch_ref.max(),
                               rtol=1e-4, atol=1e-4)
    np.testing.assert_allclose(np.asarray(num_col_ch),
                               np.full((CH,), float(C), np.float32))


if __name__ == "__main__":
    key = jax.random.PRNGKey(0)
    k_d, k_w = jax.random.split(key, 2)

    # Small, module-consistent shapes: D is (R, C) sparsity pattern, W is (R, CH*BA).
    R, C, CH, BA = 384, 48, 4, 8

    # D: deterministic binary (0/1) float32 sparsity pattern; force one empty
    # row so the nnz==0 masking path is exercised.
    D = (jax.random.uniform(k_d, (R, C)) < 0.3).astype(jnp.float32)
    D = D.at[0].set(0.0)

    # W: kaiming_uniform_ equivalent (fan_in = CH*BA, gain = sqrt(2)).
    fan_in = CH * BA
    bound = float(np.sqrt(6.0 / fan_in))
    W = jax.random.uniform(k_w, (R, CH * BA), minval=-bound, maxval=bound,
                           dtype=jnp.float32)

    i_step = 5.0

    # Default tiling (single row-block; CH*BA lane-padded 32 -> 128).
    outs = jax.block_until_ready(grad_row_forward(i_step, W, D, CH, BA, seed=0))
    _reference_check(outs, D, C, CH, BA)

    # Force the multi-block / multi-shard path to exercise the resident
    # accumulator, row padding and shard-combine logic on the same problem.
    outs2 = jax.block_until_ready(
        grad_row_forward(i_step, W, D, CH, BA, seed=123,
                         tile_rows=128, num_shards=2))
    _reference_check(outs2, D, C, CH, BA)

    print("KERNEL_OK")
</pallas_src>

<mosaic_0001>
module attributes {stable_mosaic.version = 11 : i64} {
  func.func @_spmv_cost_kernel(%arg0: i32, %arg1: i32, %arg2: memref<384x128xf32, #tpu.memory_space<vmem>>, %arg3: memref<384x1xf32, #tpu.memory_space<vmem>>, %arg4: memref<8x384xf32, #tpu.memory_space<vmem>>, %arg5: memref<384x128xf32, #tpu.memory_space<vmem>>, %arg6: memref<8x128xf32, #tpu.memory_space<vmem>>) attributes {dimension_semantics = [#tpu.dimension_semantics<parallel>, #tpu.dimension_semantics<arbitrary>], iteration_bounds = array<i64: 1, 1>, scalar_prefetch = 0 : i64, scratch_operands = 0 : i64, tpu.core_type = #tpu.core_type<tc>, window_params = [{transform_indices = @transform_0, window_bounds = array<i64: 384, 128>}, {transform_indices = @transform_1, window_bounds = array<i64: 384, 1>}, {transform_indices = @transform_2, window_bounds = array<i64: 8, 384>}, {transform_indices = @transform_3, window_bounds = array<i64: 384, 128>}, {transform_indices = @transform_4, window_bounds = array<i64: 8, 128>}]} {
    %c0 = arith.constant 0 : index
    %c0_0 = arith.constant 0 : index
    %0 = vector.load %arg2[%c0, %c0_0] : memref<384x128xf32, #tpu.memory_space<vmem>>, vector<384x128xf32>
    %cst = arith.constant dense<0xFF800000> : vector<384xf32>
    %1 = vector.multi_reduction <maximumf>, %0, %cst [1] : vector<384x128xf32> to vector<384xf32>
    %2 = vector.shape_cast %1 : vector<384xf32> to vector<384x1xf32>
    %3 = vector.broadcast %2 : vector<384x1xf32> to vector<384x128xf32>
    %4 = arith.subf %0, %3 : vector<384x128xf32>
    %5 = math.exp %4 : vector<384x128xf32>
    %cst_1 = arith.constant dense<0.000000e+00> : vector<384xf32>
    %6 = vector.multi_reduction <add>, %5, %cst_1 [1] : vector<384x128xf32> to vector<384xf32>
    %7 = vector.shape_cast %6 : vector<384xf32> to vector<384x1xf32>
    %c0_2 = arith.constant 0 : index
    %c0_3 = arith.constant 0 : index
    %8 = vector.load %arg3[%c0_2, %c0_3] : memref<384x1xf32, #tpu.memory_space<vmem>>, vector<384x1xf32>
    %9 = arith.divf %8, %7 : vector<384x1xf32>
    %10 = vector.broadcast %9 : vector<384x1xf32> to vector<384x128xf32>
    %11 = arith.mulf %5, %10 : vector<384x128xf32>
    %c0_4 = arith.constant 0 : index
    %c0_5 = arith.constant 0 : index
    %12 = vector.load %arg5[%c0_4, %c0_5] : memref<384x128xf32, #tpu.memory_space<vmem>>, vector<384x128xf32>
    tpu.vector_store %arg5[%c0_4, %c0_5], %11 {strides = array<i32>} : memref<384x128xf32, #tpu.memory_space<vmem>>, vector<384x128xf32>,
    %c0_i32 = arith.constant 0 : i32
    %13 = arith.cmpi eq, %arg1, %c0_i32 : i32
    %14 = arith.extui %13 : i1 to i32
    %c0_i32_6 = arith.constant 0 : i32
    %15 = arith.cmpi ne, %14, %c0_i32_6 : i32
    scf.if %15 {
      %cst_14 = arith.constant 0.000000e+00 : f32
      %21 = vector.broadcast %cst_14 : f32 to vector<8x128xf32>
      %c0_15 = arith.constant 0 : index
      %c0_16 = arith.constant 0 : index
      %22 = vector.load %arg6[%c0_15, %c0_16] : memref<8x128xf32, #tpu.memory_space<vmem>>, vector<8x128xf32>
      tpu.vector_store %arg6[%c0_15, %c0_16], %21 {strides = array<i32>} : memref<8x128xf32, #tpu.memory_space<vmem>>, vector<8x128xf32>,
    } else {
    }
    %c0_7 = arith.constant 0 : index
    %c0_8 = arith.constant 0 : index
    %16 = vector.load %arg6[%c0_7, %c0_8] : memref<8x128xf32, #tpu.memory_space<vmem>>, vector<8x128xf32>
    %c0_9 = arith.constant 0 : index
    %c0_10 = arith.constant 0 : index
    %17 = vector.load %arg4[%c0_9, %c0_10] : memref<8x384xf32, #tpu.memory_space<vmem>>, vector<8x384xf32>
    %cst_11 = arith.constant dense<0.000000e+00> : vector<8x128xf32>
    %18 = tpu.matmul %17, %11, %cst_11 {dimension_numbers = #tpu.dot_dimension_numbers<[1], [0], [0], [1], [0, 0, 1, 1], [], []>} : vector<8x384xf32>, vector<384x128xf32>, vector<8x128xf32> -> vector<8x128xf32>
    %19 = arith.addf %16, %18 : vector<8x128xf32>
    %c0_12 = arith.constant 0 : index
    %c0_13 = arith.constant 0 : index
    %20 = vector.load %arg6[%c0_12, %c0_13] : memref<8x128xf32, #tpu.memory_space<vmem>>, vector<8x128xf32>
    tpu.vector_store %arg6[%c0_12, %c0_13], %19 {strides = array<i32>} : memref<8x128xf32, #tpu.memory_space<vmem>>, vector<8x128xf32>,
    return
  }
  func.func @transform_0(%arg0: i32, %arg1: i32) -> (i32, i32) {
    %c1_i32 = arith.constant 1 : i32
    %0 = arith.muli %arg0, %c1_i32 : i32
    %1 = arith.addi %0, %arg1 : i32
    %c0_i32 = arith.constant 0 : i32
    %c0_i32_0 = arith.constant 0 : i32
    return %1, %c0_i32 : i32, i32
  }
  func.func @transform_1(%arg0: i32, %arg1: i32) -> (i32, i32) {
    %c1_i32 = arith.constant 1 : i32
    %0 = arith.muli %arg0, %c1_i32 : i32
    %1 = arith.addi %0, %arg1 : i32
    %c0_i32 = arith.constant 0 : i32
    %c0_i32_0 = arith.constant 0 : i32
    return %1, %c0_i32 : i32, i32
  }
  func.func @transform_2(%arg0: i32, %arg1: i32) -> (i32, i32) {
    %c1_i32 = arith.constant 1 : i32
    %0 = arith.muli %arg0, %c1_i32 : i32
    %1 = arith.addi %0, %arg1 : i32
    %c0_i32 = arith.constant 0 : i32
    %c0_i32_0 = arith.constant 0 : i32
    return %c0_i32, %1 : i32, i32
  }
  func.func @transform_3(%arg0: i32, %arg1: i32) -> (i32, i32) {
    %c1_i32 = arith.constant 1 : i32
    %0 = arith.muli %arg0, %c1_i32 : i32
    %1 = arith.addi %0, %arg1 : i32
    %c0_i32 = arith.constant 0 : i32
    %c0_i32_0 = arith.constant 0 : i32
    return %1, %c0_i32 : i32, i32
  }
  func.func @transform_4(%arg0: i32, %arg1: i32) -> (i32, i32) {
    %c0_i32 = arith.constant 0 : i32
    %c0_i32_0 = arith.constant 0 : i32
    return %arg0, %c0_i32 : i32, i32
  }
}

</mosaic_0001>

<llo_original>
// kernel: tpu_custom_call.1
$region0: #{tpu_custom_call.1}
  #allocation0 [shape = 'u32[]', space=smem, size = 0x4, offset = 0x4, fixed_abs, tag = 'smem constant byte address 0x4 - core index']
  #allocation1 [shape = 'u32[72,128]{1,0:T(1,128)}', space=vmem, size = 0x9000, scoped, tag = 'internal scratch']
  %s0 = inlined_call_operand.vmem [shape: f32[384,128], index: 0, kind: input, shape index: {}]
  %s1 = inlined_call_operand.vmem [shape: f32[384,1], index: 1, kind: input, shape index: {}]
  %s2 = inlined_call_operand.hbm [shape: f32[8,384], index: 2, kind: input, shape index: {}]
  %s3 = inlined_call_operand.hbm [shape: f32[384,128], index: 3, kind: output, shape index: {0}]
  %s4 = inlined_call_operand.hbm [shape: f32[8,128], index: 4, kind: output, shape index: {1}]
  %5 = xla_tuple %s3, %s4
  %s6 = sld [smem:[#allocation0]]
  $region38: #{tpu_custom_call.1} parent=0
    _
  %s8 = ssub.s32 1, %s6
  %s9 = scalar_select 0, %s8, %s6
  $region1: #{tpu_custom_call.1} parent=0
    #allocation2 [shape = 'u8[12288]{0}', space=vmem, size = 0x3000, scoped, tag = 'input window, operand 2, single buffered']
    #allocation3 [shape = 's32[1]{0}', space=sflag, size = 0x4, scoped, tag = 'scoped memory for tpu_custom_call.1']
    #allocation4 [shape = 's32[1]{0}', space=sflag, size = 0x4, scoped, tag = 'scoped memory for tpu_custom_call.1']
    #allocation5 [shape = 'u8[196608]{0}', space=vmem, size = 0x30000, scoped, tag = 'output window, operand 0, single buffered']
    #allocation6 [shape = 'u8[4096]{0}', space=vmem, size = 0x1000, scoped, tag = 'output window, operand 1, single buffered']
    #allocation7 [shape = 's32[1]{0}', space=sflag, size = 0x4, scoped, tag = 'scoped memory for tpu_custom_call.1']
    %10 = vsyncpa [#allocation3], 0
    %11 = vsyncpa [#allocation4], 0
    %12 = vsyncpa [#allocation7], 0
    // Predicated region
    $region2: #{tpu_custom_call.1} parent=1 // pred_check
      _
    $region3: #{tpu_custom_call.1} parent=1 // pred_check_branch
      %14 = sbr.rel (0) target = $region5
    $region4: #{tpu_custom_call.1} parent=1 // pred_region
      %s15 = sadd.s32 0, 0
      %s16 = smul.u32 48, %s15
      %p17 = scmp.lt.s32.totalorder %s16, 47
      %s18 = scalar_select %p17, %s16, 47
      %s19 = smul.addr %s18, 8
      %s20 = scalar_lea.vmem %s0, %s19
      %s21 = sadd.s32 0, 0
      %s22 = smul.u32 48, %s21
    $region5: #{tpu_custom_call.1} parent=1 // pred_fallthru
      _
    // Predicated region
    $region6: #{tpu_custom_call.1} parent=1 // pred_check
      _
    $region7: #{tpu_custom_call.1} parent=1 // pred_check_branch
      %24 = sbr.rel (0) target = $region9
    $region8: #{tpu_custom_call.1} parent=1 // pred_region
      %s25 = sadd.s32 0, 0
      %s26 = smul.u32 48, %s25
      %p27 = scmp.lt.s32.totalorder %s26, 47
      %s28 = scalar_select %p27, %s26, 47
      %s29 = smul.addr %s28, 8
      %s30 = scalar_lea.vmem %s1, %s29
      %s31 = sadd.s32 0, 0
      %s32 = smul.u32 48, %s31
    $region9: #{tpu_custom_call.1} parent=1 // pred_fallthru
      _
    // Predicated region
    $region10: #{tpu_custom_call.1} parent=1 // pred_check
      _
    $region11: #{tpu_custom_call.1} parent=1 // pred_check_branch
      %34 = sbr.rel (0) target = $region13
    $region12: #{tpu_custom_call.1} parent=1 // pred_region
      %s35 = sadd.s32 0, 0
      %s36 = smul.u32 3, %s35
      %38 = vsyncadd [#allocation3], 0
      %s39 = smul.addr %s36, 8
      %s40 = scalar_lea.hbm %s2, %s39
      %s42 = sshll.u32 %s40, 4
      %s43 = int_to_ptr.hbm [resolvable:$true] %s42
      %s44 = sshll.u32 [#allocation2], 4
      %s45 = int_to_ptr.vmem [resolvable:$true] %s44
      %47 = dma.hbm_to_vmem [thread:$0]  %s43, 384, %s45, [#allocation3]
    $region13: #{tpu_custom_call.1} parent=1 // pred_fallthru
      _
    // Predicated region
    $region14: #{tpu_custom_call.1} parent=1 // pred_check
      _
    $region15: #{tpu_custom_call.1} parent=1 // pred_check_branch
      %49 = sbr.rel (0) target = $region17
    $region16: #{tpu_custom_call.1} parent=1 // pred_region
      %51 = dma.done [#allocation3], 384
    $region17: #{tpu_custom_call.1} parent=1 // pred_fallthru
      _
    %s52 = sadd.s32 0, 0
    %s53 = smul.u32 48, %s52
    %p54 = scmp.lt.s32.totalorder %s53, 47
    %s55 = scalar_select %p54, %s53, 47
    %s56 = smul.addr %s55, 8
    %s57 = scalar_lea.vmem %s0, %s56
    %s58 = sadd.s32 0, 0
    %s59 = smul.u32 48, %s58
    %p60 = scmp.lt.s32.totalorder %s59, 47
    %s61 = scalar_select %p60, %s59, 47
    %s62 = smul.addr %s61, 8
    %s63 = scalar_lea.vmem %s1, %s62
    %s64 = sadd.s32 0, 0
    %s65 = smul.u32 48, %s64
    %p66 = scmp.lt.s32.totalorder %s65, 47
    %s67 = scalar_select %p66, %s65, 47
    %s68 = smul.addr %s67, 8
    %s69 = scalar_lea.vmem %s0, %s68
    %s70 = sadd.s32 0, 0
    %s71 = smul.u32 48, %s70
    %s72 = sadd.s32 0, 0
    %s73 = smul.u32 48, %s72
    %p74 = scmp.lt.s32.totalorder %s73, 47
    %s75 = scalar_select %p74, %s73, 47
    %s76 = smul.addr %s75, 8
    %s77 = scalar_lea.vmem %s1, %s76
    %s78 = sadd.s32 0, 0
    %s79 = smul.u32 48, %s78
    %s80 = sadd.s32 0, 0
    %s81 = smul.u32 3, %s80
    %s82 = sadd.s32 0, 0
    %s83 = smul.u32 48, %s82
    %v84 = vld [vmem:[%s69] sm:$0xff]
    %v85 = vld [vmem:[%s69 + $0x8] sm:$0xff]
    %v86 = vld [vmem:[%s69 + $0x10] sm:$0xff]
    %v87 = vld [vmem:[%s69 + $0x18] sm:$0xff]
    %v88 = vld [vmem:[%s69 + $0x20] sm:$0xff]
    %v89 = vld [vmem:[%s69 + $0x28] sm:$0xff]
    %v90 = vld [vmem:[%s69 + $0x30] sm:$0xff]
    %v91 = vld [vmem:[%s69 + $0x38] sm:$0xff]
    %v92 = vld [vmem:[%s69 + $0x40] sm:$0xff]
    %v93 = vld [vmem:[%s69 + $0x48] sm:$0xff]
    %v94 = vld [vmem:[%s69 + $0x50] sm:$0xff]
    %v95 = vld [vmem:[%s69 + $0x58] sm:$0xff]
    %v96 = vld [vmem:[%s69 + $0x60] sm:$0xff]
    %v97 = vld [vmem:[%s69 + $0x68] sm:$0xff]
    %v98 = vld [vmem:[%s69 + $0x70] sm:$0xff]
    %v99 = vld [vmem:[%s69 + $0x78] sm:$0xff]
    %v100 = vld [vmem:[%s69 + $0x80] sm:$0xff]
    %v101 = vld [vmem:[%s69 + $0x88] sm:$0xff]
    %v102 = vld [vmem:[%s69 + $0x90] sm:$0xff]
    %v103 = vld [vmem:[%s69 + $0x98] sm:$0xff]
    %v104 = vld [vmem:[%s69 + $0xa0] sm:$0xff]
    %v105 = vld [vmem:[%s69 + $0xa8] sm:$0xff]
    %v106 = vld [vmem:[%s69 + $0xb0] sm:$0xff]
    %v107 = vld [vmem:[%s69 + $0xb8] sm:$0xff]
    %v108 = vld [vmem:[%s69 + $0xc0] sm:$0xff]
    %v109 = vld [vmem:[%s69 + $0xc8] sm:$0xff]
    %v110 = vld [vmem:[%s69 + $0xd0] sm:$0xff]
    %v111 = vld [vmem:[%s69 + $0xd8] sm:$0xff]
    %v112 = vld [vmem:[%s69 + $0xe0] sm:$0xff]
    %v113 = vld [vmem:[%s69 + $0xe8] sm:$0xff]
    %v114 = vld [vmem:[%s69 + $0xf0] sm:$0xff]
    %v115 = vld [vmem:[%s69 + $0xf8] sm:$0xff]
    %v116 = vld [vmem:[%s69 + $0x100] sm:$0xff]
    %v117 = vld [vmem:[%s69 + $0x108] sm:$0xff]
    %v118 = vld [vmem:[%s69 + $0x110] sm:$0xff]
    %v119 = vld [vmem:[%s69 + $0x118] sm:$0xff]
    %v120 = vld [vmem:[%s69 + $0x120] sm:$0xff]
    %v121 = vld [vmem:[%s69 + $0x128] sm:$0xff]
    %v122 = vld [vmem:[%s69 + $0x130] sm:$0xff]
    %v123 = vld [vmem:[%s69 + $0x138] sm:$0xff]
    %v124 = vld [vmem:[%s69 + $0x140] sm:$0xff]
    %v125 = vld [vmem:[%s69 + $0x148] sm:$0xff]
    %v126 = vld [vmem:[%s69 + $0x150] sm:$0xff]
    %v127 = vld [vmem:[%s69 + $0x158] sm:$0xff]
    %v128 = vld [vmem:[%s69 + $0x160] sm:$0xff]
    %v129 = vld [vmem:[%s69 + $0x168] sm:$0xff]
    %v130 = vld [vmem:[%s69 + $0x170] sm:$0xff]
    %v131 = vld [vmem:[%s69 + $0x178] sm:$0xff]
    %132 = vmax.xlane.f32.xlu0 %v84
    %v133 = vpop.xlane.xlu0 %132
    %134 = vmax.xlane.f32.xlu0 %v85
    %v135 = vpop.xlane.xlu0 %134
    %136 = vmax.xlane.f32.xlu0 %v86
    %v137 = vpop.xlane.xlu0 %136
    %138 = vmax.xlane.f32.xlu0 %v87
    %v139 = vpop.xlane.xlu0 %138
    %140 = vmax.xlane.f32.xlu0 %v88
    %v141 = vpop.xlane.xlu0 %140
    %142 = vmax.xlane.f32.xlu0 %v89
    %v143 = vpop.xlane.xlu0 %142
    %144 = vmax.xlane.f32.xlu0 %v90
    %v145 = vpop.xlane.xlu0 %144
    %146 = vmax.xlane.f32.xlu0 %v91
    %v147 = vpop.xlane.xlu0 %146
    %148 = vmax.xlane.f32.xlu0 %v92
    %v149 = vpop.xlane.xlu0 %148
    %150 = vmax.xlane.f32.xlu0 %v93
    %v151 = vpop.xlane.xlu0 %150
    %152 = vmax.xlane.f32.xlu0 %v94
    %v153 = vpop.xlane.xlu0 %152
    %154 = vmax.xlane.f32.xlu0 %v95
    %v155 = vpop.xlane.xlu0 %154
    %156 = vmax.xlane.f32.xlu0 %v96
    %v157 = vpop.xlane.xlu0 %156
    %158 = vmax.xlane.f32.xlu0 %v97
    %v159 = vpop.xlane.xlu0 %158
    %160 = vmax.xlane.f32.xlu0 %v98
    %v161 = vpop.xlane.xlu0 %160
    %162 = vmax.xlane.f32.xlu0 %v99
    %v163 = vpop.xlane.xlu0 %162
    %164 = vmax.xlane.f32.xlu0 %v100
    %v165 = vpop.xlane.xlu0 %164
    %166 = vmax.xlane.f32.xlu0 %v101
    %v167 = vpop.xlane.xlu0 %166
    %168 = vmax.xlane.f32.xlu0 %v102
    %v169 = vpop.xlane.xlu0 %168
    %170 = vmax.xlane.f32.xlu0 %v103
    %v171 = vpop.xlane.xlu0 %170
    %172 = vmax.xlane.f32.xlu0 %v104
    %v173 = vpop.xlane.xlu0 %172
    %174 = vmax.xlane.f32.xlu0 %v105
    %v175 = vpop.xlane.xlu0 %174
    %176 = vmax.xlane.f32.xlu0 %v106
    %v177 = vpop.xlane.xlu0 %176
    %178 = vmax.xlane.f32.xlu0 %v107
    %v179 = vpop.xlane.xlu0 %178
    %180 = vmax.xlane.f32.xlu0 %v108
    %v181 = vpop.xlane.xlu0 %180
    %182 = vmax.xlane.f32.xlu0 %v109
    %v183 = vpop.xlane.xlu0 %182
    %184 = vmax.xlane.f32.xlu0 %v110
    %v185 = vpop.xlane.xlu0 %184
    %186 = vmax.xlane.f32.xlu0 %v111
    %v187 = vpop.xlane.xlu0 %186
    %188 = vmax.xlane.f32.xlu0 %v112
    %v189 = vpop.xlane.xlu0 %188
    %190 = vmax.xlane.f32.xlu0 %v113
    %v191 = vpop.xlane.xlu0 %190
    %192 = vmax.xlane.f32.xlu0 %v114
    %v193 = vpop.xlane.xlu0 %192
    %194 = vmax.xlane.f32.xlu0 %v115
    %v195 = vpop.xlane.xlu0 %194
    %196 = vmax.xlane.f32.xlu0 %v116
    %v197 = vpop.xlane.xlu0 %196
    %198 = vmax.xlane.f32.xlu0 %v117
    %v199 = vpop.xlane.xlu0 %198
    %200 = vmax.xlane.f32.xlu0 %v118
    %v201 = vpop.xlane.xlu0 %200
    %202 = vmax.xlane.f32.xlu0 %v119
    %v203 = vpop.xlane.xlu0 %202
    %204 = vmax.xlane.f32.xlu0 %v120
    %v205 = vpop.xlane.xlu0 %204
    %206 = vmax.xlane.f32.xlu0 %v121
    %v207 = vpop.xlane.xlu0 %206
    %208 = vmax.xlane.f32.xlu0 %v122
    %v209 = vpop.xlane.xlu0 %208
    %210 = vmax.xlane.f32.xlu0 %v123
    %v211 = vpop.xlane.xlu0 %210
    %212 = vmax.xlane.f32.xlu0 %v124
    %v213 = vpop.xlane.xlu0 %212
    %214 = vmax.xlane.f32.xlu0 %v125
    %v215 = vpop.xlane.xlu0 %214
    %216 = vmax.xlane.f32.xlu0 %v126
    %v217 = vpop.xlane.xlu0 %216
    %218 = vmax.xlane.f32.xlu0 %v127
    %v219 = vpop.xlane.xlu0 %218
    %220 = vmax.xlane.f32.xlu0 %v128
    %v221 = vpop.xlane.xlu0 %220
    %222 = vmax.xlane.f32.xlu0 %v129
    %v223 = vpop.xlane.xlu0 %222
    %224 = vmax.xlane.f32.xlu0 %v130
    %v225 = vpop.xlane.xlu0 %224
    %226 = vmax.xlane.f32.xlu0 %v131
    %v227 = vpop.xlane.xlu0 %226
    %v228 = vsub.f32 %v84, %v133
    %v229 = vsub.f32 %v85, %v135
    %v230 = vsub.f32 %v86, %v137
    %v231 = vsub.f32 %v87, %v139
    %v232 = vsub.f32 %v88, %v141
    %v233 = vsub.f32 %v89, %v143
    %v234 = vsub.f32 %v90, %v145
    %v235 = vsub.f32 %v91, %v147
    %v236 = vsub.f32 %v92, %v149
    %v237 = vsub.f32 %v93, %v151
    %v238 = vsub.f32 %v94, %v153
    %v239 = vsub.f32 %v95, %v155
    %v240 = vsub.f32 %v96, %v157
    %v241 = vsub.f32 %v97, %v159
    %v242 = vsub.f32 %v98, %v161
    %v243 = vsub.f32 %v99, %v163
    %v244 = vsub.f32 %v100, %v165
    %v245 = vsub.f32 %v101, %v167
    %v246 = vsub.f32 %v102, %v169
    %v247 = vsub.f32 %v103, %v171
    %v248 = vsub.f32 %v104, %v173
    %v249 = vsub.f32 %v105, %v175
    %v250 = vsub.f32 %v106, %v177
    %v251 = vsub.f32 %v107, %v179
    %v252 = vsub.f32 %v108, %v181
    %v253 = vsub.f32 %v109, %v183
    %v254 = vsub.f32 %v110, %v185
    %v255 = vsub.f32 %v111, %v187
    %v256 = vsub.f32 %v112, %v189
    %v257 = vsub.f32 %v113, %v191
    %v258 = vsub.f32 %v114, %v193
    %v259 = vsub.f32 %v115, %v195
    %v260 = vsub.f32 %v116, %v197
    %v261 = vsub.f32 %v117, %v199
    %v262 = vsub.f32 %v118, %v201
    %v263 = vsub.f32 %v119, %v203
    %v264 = vsub.f32 %v120, %v205
    %v265 = vsub.f32 %v121, %v207
    %v266 = vsub.f32 %v122, %v209
    %v267 = vsub.f32 %v123, %v211
    %v268 = vsub.f32 %v124, %v213
    %v269 = vsub.f32 %v125, %v215
    %v270 = vsub.f32 %v126, %v217
    %v271 = vsub.f32 %v127, %v219
    %v272 = vsub.f32 %v128, %v221
    %v273 = vsub.f32 %v129, %v223
    %v274 = vsub.f32 %v130, %v225
    %v275 = vsub.f32 %v131, %v227
    %v276 = vmul.f32 %v228, 1.442695
    %v277 = vpow.pop %v276
    %v278 = vmul.f32 %v229, 1.442695
    %v279 = vpow.pop %v278
    %v280 = vmul.f32 %v230, 1.442695
    %v281 = vpow.pop %v280
    %v282 = vmul.f32 %v231, 1.442695
    %v283 = vpow.pop %v282
    %v284 = vmul.f32 %v232, 1.442695
    %v285 = vpow.pop %v284
    %v286 = vmul.f32 %v233, 1.442695
    %v287 = vpow.pop %v286
    %v288 = vmul.f32 %v234, 1.442695
    %v289 = vpow.pop %v288
    %v290 = vmul.f32 %v235, 1.442695
    %v291 = vpow.pop %v290
    %v292 = vmul.f32 %v236, 1.442695
    %v293 = vpow.pop %v292
    %v294 = vmul.f32 %v237, 1.442695
    %v295 = vpow.pop %v294
    %v296 = vmul.f32 %v238, 1.442695
    %v297 = vpow.pop %v296
    %v298 = vmul.f32 %v239, 1.442695
    %v299 = vpow.pop %v298
    %v300 = vmul.f32 %v240, 1.442695
    %v301 = vpow.pop %v300
    %v302 = vmul.f32 %v241, 1.442695
    %v303 = vpow.pop %v302
    %v304 = vmul.f32 %v242, 1.442695
    %v305 = vpow.pop %v304
    %v306 = vmul.f32 %v243, 1.442695
    %v307 = vpow.pop %v306
    %v308 = vmul.f32 %v244, 1.442695
    %v309 = vpow.pop %v308
    %v310 = vmul.f32 %v245, 1.442695
    %v311 = vpow.pop %v310
    %v312 = vmul.f32 %v246, 1.442695
    %v313 = vpow.pop %v312
    %v314 = vmul.f32 %v247, 1.442695
    %v315 = vpow.pop %v314
    %v316 = vmul.f32 %v248, 1.442695
    %v317 = vpow.pop %v316
    %v318 = vmul.f32 %v249, 1.442695
    %v319 = vpow.pop %v318
    %v320 = vmul.f32 %v250, 1.442695
    %v321 = vpow.pop %v320
    %v322 = vmul.f32 %v251, 1.442695
    %v323 = vpow.pop %v322
    %v324 = vmul.f32 %v252, 1.442695
    %v325 = vpow.pop %v324
    %v326 = vmul.f32 %v253, 1.442695
    %v327 = vpow.pop %v326
    %v328 = vmul.f32 %v254, 1.442695
    %v329 = vpow.pop %v328
    %v330 = vmul.f32 %v255, 1.442695
    %v331 = vpow.pop %v330
    %v332 = vmul.f32 %v256, 1.442695
    %v333 = vpow.pop %v332
    %v334 = vmul.f32 %v257, 1.442695
    %v335 = vpow.pop %v334
    %v336 = vmul.f32 %v258, 1.442695
    %v337 = vpow.pop %v336
    %v338 = vmul.f32 %v259, 1.442695
    %v339 = vpow.pop %v338
    %v340 = vmul.f32 %v260, 1.442695
    %v341 = vpow.pop %v340
    %v342 = vmul.f32 %v261, 1.442695
    %v343 = vpow.pop %v342
    %v344 = vmul.f32 %v262, 1.442695
    %v345 = vpow.pop %v344
    %v346 = vmul.f32 %v263, 1.442695
    %v347 = vpow.pop %v346
    %v348 = vmul.f32 %v264, 1.442695
    %v349 = vpow.pop %v348
    %v350 = vmul.f32 %v265, 1.442695
    %v351 = vpow.pop %v350
    %v352 = vmul.f32 %v266, 1.442695
    %v353 = vpow.pop %v352
    %v354 = vmul.f32 %v267, 1.442695
    %v355 = vpow.pop %v354
    %v356 = vmul.f32 %v268, 1.442695
    %v357 = vpow.pop %v356
    %v358 = vmul.f32 %v269, 1.442695
    %v359 = vpow.pop %v358
    %v360 = vmul.f32 %v270, 1.442695
    %v361 = vpow.pop %v360
    %v362 = vmul.f32 %v271, 1.442695
    %v363 = vpow.pop %v362
    %v364 = vmul.f32 %v272, 1.442695
    %v365 = vpow.pop %v364
    %v366 = vmul.f32 %v273, 1.442695
    %v367 = vpow.pop %v366
    %v368 = vmul.f32 %v274, 1.442695
    %v369 = vpow.pop %v368
    %v370 = vmul.f32 %v275, 1.442695
    %v371 = vpow.pop %v370
    %372 = vadd.xlane.f32.xlu0 %v277
    %v373 = vpop.xlane.xlu0 %372
    %374 = vadd.xlane.f32.xlu0 %v279
    %v375 = vpop.xlane.xlu0 %374
    %376 = vadd.xlane.f32.xlu0 %v281
    %v377 = vpop.xlane.xlu0 %376
    %378 = vadd.xlane.f32.xlu0 %v283
    %v379 = vpop.xlane.xlu0 %378
    %380 = vadd.xlane.f32.xlu0 %v285
    %v381 = vpop.xlane.xlu0 %380
    %382 = vadd.xlane.f32.xlu0 %v287
    %v383 = vpop.xlane.xlu0 %382
    %384 = vadd.xlane.f32.xlu0 %v289
    %v385 = vpop.xlane.xlu0 %384
    %386 = vadd.xlane.f32.xlu0 %v291
    %v387 = vpop.xlane.xlu0 %386
    %388 = vadd.xlane.f32.xlu0 %v293
    %v389 = vpop.xlane.xlu0 %388
    %390 = vadd.xlane.f32.xlu0 %v295
    %v391 = vpop.xlane.xlu0 %390
    %392 = vadd.xlane.f32.xlu0 %v297
    %v393 = vpop.xlane.xlu0 %392
    %394 = vadd.xlane.f32.xlu0 %v299
    %v395 = vpop.xlane.xlu0 %394
    %396 = vadd.xlane.f32.xlu0 %v301
    %v397 = vpop.xlane.xlu0 %396
    %398 = vadd.xlane.f32.xlu0 %v303
    %v399 = vpop.xlane.xlu0 %398
    %400 = vadd.xlane.f32.xlu0 %v305
    %v401 = vpop.xlane.xlu0 %400
    %402 = vadd.xlane.f32.xlu0 %v307
    %v403 = vpop.xlane.xlu0 %402
    %404 = vadd.xlane.f32.xlu0 %v309
    %v405 = vpop.xlane.xlu0 %404
    %406 = vadd.xlane.f32.xlu0 %v311
    %v407 = vpop.xlane.xlu0 %406
    %408 = vadd.xlane.f32.xlu0 %v313
    %v409 = vpop.xlane.xlu0 %408
    %410 = vadd.xlane.f32.xlu0 %v315
    %v411 = vpop.xlane.xlu0 %410
    %412 = vadd.xlane.f32.xlu0 %v317
    %v413 = vpop.xlane.xlu0 %412
    %414 = vadd.xlane.f32.xlu0 %v319
    %v415 = vpop.xlane.xlu0 %414
    %416 = vadd.xlane.f32.xlu0 %v321
    %v417 = vpop.xlane.xlu0 %416
    %418 = vadd.xlane.f32.xlu0 %v323
    %v419 = vpop.xlane.xlu0 %418
    %420 = vadd.xlane.f32.xlu0 %v325
    %v421 = vpop.xlane.xlu0 %420
    %422 = vadd.xlane.f32.xlu0 %v327
    %v423 = vpop.xlane.xlu0 %422
    %424 = vadd.xlane.f32.xlu0 %v329
    %v425 = vpop.xlane.xlu0 %424
    %426 = vadd.xlane.f32.xlu0 %v331
    %v427 = vpop.xlane.xlu0 %426
    %428 = vadd.xlane.f32.xlu0 %v333
    %v429 = vpop.xlane.xlu0 %428
    %430 = vadd.xlane.f32.xlu0 %v335
    %v431 = vpop.xlane.xlu0 %430
    %432 = vadd.xlane.f32.xlu0 %v337
    %v433 = vpop.xlane.xlu0 %432
    %434 = vadd.xlane.f32.xlu0 %v339
    %v435 = vpop.xlane.xlu0 %434
    %436 = vadd.xlane.f32.xlu0 %v341
    %v437 = vpop.xlane.xlu0 %436
    %438 = vadd.xlane.f32.xlu0 %v343
    %v439 = vpop.xlane.xlu0 %438
    %440 = vadd.xlane.f32.xlu0 %v345
    %v441 = vpop.xlane.xlu0 %440
    %442 = vadd.xlane.f32.xlu0 %v347
    %v443 = vpop.xlane.xlu0 %442
    %444 = vadd.xlane.f32.xlu0 %v349
    %v445 = vpop.xlane.xlu0 %444
    %446 = vadd.xlane.f32.xlu0 %v351
    %v447 = vpop.xlane.xlu0 %446
    %448 = vadd.xlane.f32.xlu0 %v353
    %v449 = vpop.xlane.xlu0 %448
    %450 = vadd.xlane.f32.xlu0 %v355
    %v451 = vpop.xlane.xlu0 %450
    %452 = vadd.xlane.f32.xlu0 %v357
    %v453 = vpop.xlane.xlu0 %452
    %454 = vadd.xlane.f32.xlu0 %v359
    %v455 = vpop.xlane.xlu0 %454
    %456 = vadd.xlane.f32.xlu0 %v361
    %v457 = vpop.xlane.xlu0 %456
    %458 = vadd.xlane.f32.xlu0 %v363
    %v459 = vpop.xlane.xlu0 %458
    %460 = vadd.xlane.f32.xlu0 %v365
    %v461 = vpop.xlane.xlu0 %460
    %462 = vadd.xlane.f32.xlu0 %v367
    %v463 = vpop.xlane.xlu0 %462
    %464 = vadd.xlane.f32.xlu0 %v369
    %v465 = vpop.xlane.xlu0 %464
    %466 = vadd.xlane.f32.xlu0 %v371
    %v467 = vpop.xlane.xlu0 %466
    %v468 = vld [vmem:[%s77] sm:$0xff]
    %v469 = vld [vmem:[%s77 + $0x8] sm:$0xff]
    %v470 = vld [vmem:[%s77 + $0x10] sm:$0xff]
    %v471 = vld [vmem:[%s77 + $0x18] sm:$0xff]
    %v472 = vld [vmem:[%s77 + $0x20] sm:$0xff]
    %v473 = vld [vmem:[%s77 + $0x28] sm:$0xff]
    %v474 = vld [vmem:[%s77 + $0x30] sm:$0xff]
    %v475 = vld [vmem:[%s77 + $0x38] sm:$0xff]
    %v476 = vld [vmem:[%s77 + $0x40] sm:$0xff]
    %v477 = vld [vmem:[%s77 + $0x48] sm:$0xff]
    %v478 = vld [vmem:[%s77 + $0x50] sm:$0xff]
    %v479 = vld [vmem:[%s77 + $0x58] sm:$0xff]
    %v480 = vld [vmem:[%s77 + $0x60] sm:$0xff]
    %v481 = vld [vmem:[%s77 + $0x68] sm:$0xff]
    %v482 = vld [vmem:[%s77 + $0x70] sm:$0xff]
    %v483 = vld [vmem:[%s77 + $0x78] sm:$0xff]
    %v484 = vld [vmem:[%s77 + $0x80] sm:$0xff]
    %v485 = vld [vmem:[%s77 + $0x88] sm:$0xff]
    %v486 = vld [vmem:[%s77 + $0x90] sm:$0xff]
    %v487 = vld [vmem:[%s77 + $0x98] sm:$0xff]
    %v488 = vld [vmem:[%s77 + $0xa0] sm:$0xff]
    %v489 = vld [vmem:[%s77 + $0xa8] sm:$0xff]
    %v490 = vld [vmem:[%s77 + $0xb0] sm:$0xff]
    %v491 = vld [vmem:[%s77 + $0xb8] sm:$0xff]
    %v492 = vld [vmem:[%s77 + $0xc0] sm:$0xff]
    %v493 = vld [vmem:[%s77 + $0xc8] sm:$0xff]
    %v494 = vld [vmem:[%s77 + $0xd0] sm:$0xff]
    %v495 = vld [vmem:[%s77 + $0xd8] sm:$0xff]
    %v496 = vld [vmem:[%s77 + $0xe0] sm:$0xff]
    %v497 = vld [vmem:[%s77 + $0xe8] sm:$0xff]
    %v498 = vld [vmem:[%s77 + $0xf0] sm:$0xff]
    %v499 = vld [vmem:[%s77 + $0xf8] sm:$0xff]
    %v500 = vld [vmem:[%s77 + $0x100] sm:$0xff]
    %v501 = vld [vmem:[%s77 + $0x108] sm:$0xff]
    %v502 = vld [vmem:[%s77 + $0x110] sm:$0xff]
    %v503 = vld [vmem:[%s77 + $0x118] sm:$0xff]
    %v504 = vld [vmem:[%s77 + $0x120] sm:$0xff]
    %v505 = vld [vmem:[%s77 + $0x128] sm:$0xff]
    %v506 = vld [vmem:[%s77 + $0x130] sm:$0xff]
    %v507 = vld [vmem:[%s77 + $0x138] sm:$0xff]
    %v508 = vld [vmem:[%s77 + $0x140] sm:$0xff]
    %v509 = vld [vmem:[%s77 + $0x148] sm:$0xff]
    %v510 = vld [vmem:[%s77 + $0x150] sm:$0xff]
    %v511 = vld [vmem:[%s77 + $0x158] sm:$0xff]
    %v512 = vld [vmem:[%s77 + $0x160] sm:$0xff]
    %v513 = vld [vmem:[%s77 + $0x168] sm:$0xff]
    %v514 = vld [vmem:[%s77 + $0x170] sm:$0xff]
    %v515 = vld [vmem:[%s77 + $0x178] sm:$0xff]
    %v516 = vrcp.pop %v373
    %v517 = vmul.f32 %v373, %v516
    %v518 = vsub.f32 1.0, %v517
    %v519 = vmul.f32 %v516, %v518
    %v520 = vadd.f32 %v516, %v519
    %vm521 = vweird.f32 %v373
    %vm522 = vweird.f32 %v516
    %vm523 = vmor %vm521, %vm522
    %v524 = vsel %vm523, %v516, %v520
    %v525 = vand.u32 2147483647, %v373
    %vm526 = vcmp.eq.f32.partialorder %v525, 8.507059e+37
    %v527 = vand.u32 %v373, 2147483648
    %v528 = vor.u32 1.1754944e-38, %v527
    %v529 = vsel %vm526, %v528, %v524
    %v530 = vmul.f32 %v468, %v529
    %v531 = vrcp.pop %v375
    %v532 = vmul.f32 %v375, %v531
    %v533 = vsub.f32 1.0, %v532
    %v534 = vmul.f32 %v531, %v533
    %v535 = vadd.f32 %v531, %v534
    %vm536 = vweird.f32 %v375
    %vm537 = vweird.f32 %v531
    %vm538 = vmor %vm536, %vm537
    %v539 = vsel %vm538, %v531, %v535
    %v540 = vand.u32 2147483647, %v375
    %vm541 = vcmp.eq.f32.partialorder %v540, 8.507059e+37
    %v542 = vand.u32 %v375, 2147483648
    %v543 = vor.u32 1.1754944e-38, %v542
    %v544 = vsel %vm541, %v543, %v539
    %v545 = vmul.f32 %v469, %v544
    %v546 = vrcp.pop %v377
    %v547 = vmul.f32 %v377, %v546
    %v548 = vsub.f32 1.0, %v547
    %v549 = vmul.f32 %v546, %v548
    %v550 = vadd.f32 %v546, %v549
    %vm551 = vweird.f32 %v377
    %vm552 = vweird.f32 %v546
    %vm553 = vmor %vm551, %vm552
    %v554 = vsel %vm553, %v546, %v550
    %v555 = vand.u32 2147483647, %v377
    %vm556 = vcmp.eq.f32.partialorder %v555, 8.507059e+37
    %v557 = vand.u32 %v377, 2147483648
    %v558 = vor.u32 1.1754944e-38, %v557
    %v559 = vsel %vm556, %v558, %v554
    %v560 = vmul.f32 %v470, %v559
    %v561 = vrcp.pop %v379
    %v562 = vmul.f32 %v379, %v561
    %v563 = vsub.f32 1.0, %v562
    %v564 = vmul.f32 %v561, %v563
    %v565 = vadd.f32 %v561, %v564
    %vm566 = vweird.f32 %v379
    %vm567 = vweird.f32 %v561
    %vm568 = vmor %vm566, %vm567
    %v569 = vsel %vm568, %v561, %v565
    %v570 = vand.u32 2147483647, %v379
    %vm571 = vcmp.eq.f32.partialorder %v570, 8.507059e+37
    %v572 = vand.u32 %v379, 2147483648
    %v573 = vor.u32 1.1754944e-38, %v572
    %v574 = vsel %vm571, %v573, %v569
    %v575 = vmul.f32 %v471, %v574
    %v576 = vrcp.pop %v381
    %v577 = vmul.f32 %v381, %v576
    %v578 = vsub.f32 1.0, %v577
    %v579 = vmul.f32 %v576, %v578
    %v580 = vadd.f32 %v576, %v579
    %vm581 = vweird.f32 %v381
    %vm582 = vweird.f32 %v576
    %vm583 = vmor %vm581, %vm582
    %v584 = vsel %vm583, %v576, %v580
    %v585 = vand.u32 2147483647, %v381
    %vm586 = vcmp.eq.f32.partialorder %v585, 8.507059e+37
    %v587 = vand.u32 %v381, 2147483648
    %v588 = vor.u32 1.1754944e-38, %v587
    %v589 = vsel %vm586, %v588, %v584
    %v590 = vmul.f32 %v472, %v589
    %v591 = vrcp.pop %v383
    %v592 = vmul.f32 %v383, %v591
    %v593 = vsub.f32 1.0, %v592
    %v594 = vmul.f32 %v591, %v593
    %v595 = vadd.f32 %v591, %v594
    %vm596 = vweird.f32 %v383
    %vm597 = vweird.f32 %v591
    %vm598 = vmor %vm596, %vm597
    %v599 = vsel %vm598, %v591, %v595
    %v600 = vand.u32 2147483647, %v383
    %vm601 = vcmp.eq.f32.partialorder %v600, 8.507059e+37
    %v602 = vand.u32 %v383, 2147483648
    %v603 = vor.u32 1.1754944e-38, %v602
    %v604 = vsel %vm601, %v603, %v599
    %v605 = vmul.f32 %v473, %v604
    %v606 = vrcp.pop %v385
    %v607 = vmul.f32 %v385, %v606
    %v608 = vsub.f32 1.0, %v607
    %v609 = vmul.f32 %v606, %v608
    %v610 = vadd.f32 %v606, %v609
    %vm611 = vweird.f32 %v385
    %vm612 = vweird.f32 %v606
    %vm613 = vmor %vm611, %vm612
    %v614 = vsel %vm613, %v606, %v610
    %v615 = vand.u32 2147483647, %v385
    %vm616 = vcmp.eq.f32.partialorder %v615, 8.507059e+37
    %v617 = vand.u32 %v385, 2147483648
    %v618 = vor.u32 1.1754944e-38, %v617
    %v619 = vsel %vm616, %v618, %v614
    %v620 = vmul.f32 %v474, %v619
    %v621 = vrcp.pop %v387
    %v622 = vmul.f32 %v387, %v621
    %v623 = vsub.f32 1.0, %v622
    %v624 = vmul.f32 %v621, %v623
    %v625 = vadd.f32 %v621, %v624
    %vm626 = vweird.f32 %v387
    %vm627 = vweird.f32 %v621
    %vm628 = vmor %vm626, %vm627
    %v629 = vsel %vm628, %v621, %v625
    %v630 = vand.u32 2147483647, %v387
    %vm631 = vcmp.eq.f32.partialorder %v630, 8.507059e+37
    %v632 = vand.u32 %v387, 2147483648
    %v633 = vor.u32 1.1754944e-38, %v632
    %v634 = vsel %vm631, %v633, %v629
    %v635 = vmul.f32 %v475, %v634
    %v636 = vrcp.pop %v389
    %v637 = vmul.f32 %v389, %v636
    %v638 = vsub.f32 1.0, %v637
    %v639 = vmul.f32 %v636, %v638
    %v640 = vadd.f32 %v636, %v639
    %vm641 = vweird.f32 %v389
    %vm642 = vweird.f32 %v636
    %vm643 = vmor %vm641, %vm642
    %v644 = vsel %vm643, %v636, %v640
    %v645 = vand.u32 2147483647, %v389
    %vm646 = vcmp.eq.f32.partialorder %v645, 8.507059e+37
    %v647 = vand.u32 %v389, 2147483648
    %v648 = vor.u32 1.1754944e-38, %v647
    %v649 = vsel %vm646, %v648, %v644
    %v650 = vmul.f32 %v476, %v649
    %v651 = vrcp.pop %v391
    %v652 = vmul.f32 %v391, %v651
    %v653 = vsub.f32 1.0, %v652
    %v654 = vmul.f32 %v651, %v653
    %v655 = vadd.f32 %v651, %v654
    %vm656 = vweird.f32 %v391
    %vm657 = vweird.f32 %v651
    %vm658 = vmor %vm656, %vm657
    %v659 = vsel %vm658, %v651, %v655
    %v660 = vand.u32 2147483647, %v391
    %vm661 = vcmp.eq.f32.partialorder %v660, 8.507059e+37
    %v662 = vand.u32 %v391, 2147483648
    %v663 = vor.u32 1.1754944e-38, %v662
    %v664 = vsel %vm661, %v663, %v659
    %v665 = vmul.f32 %v477, %v664
    %v666 = vrcp.pop %v393
    %v667 = vmul.f32 %v393, %v666
    %v668 = vsub.f32 1.0, %v667
    %v669 = vmul.f32 %v666, %v668
    %v670 = vadd.f32 %v666, %v669
    %vm671 = vweird.f32 %v393
    %vm672 = vweird.f32 %v666
    %vm673 = vmor %vm671, %vm672
    %v674 = vsel %vm673, %v666, %v670
    %v675 = vand.u32 2147483647, %v393
    %vm676 = vcmp.eq.f32.partialorder %v675, 8.507059e+37
    %v677 = vand.u32 %v393, 2147483648
    %v678 = vor.u32 1.1754944e-38, %v677
    %v679 = vsel %vm676, %v678, %v674
    %v680 = vmul.f32 %v478, %v679
    %v681 = vrcp.pop %v395
    %v682 = vmul.f32 %v395, %v681
    %v683 = vsub.f32 1.0, %v682
    %v684 = vmul.f32 %v681, %v683
    %v685 = vadd.f32 %v681, %v684
    %vm686 = vweird.f32 %v395
    %vm687 = vweird.f32 %v681
    %vm688 = vmor %vm686, %vm687
    %v689 = vsel %vm688, %v681, %v685
    %v690 = vand.u32 2147483647, %v395
    %vm691 = vcmp.eq.f32.partialorder %v690, 8.507059e+37
    %v692 = vand.u32 %v395, 2147483648
    %v693 = vor.u32 1.1754944e-38, %v692
    %v694 = vsel %vm691, %v693, %v689
    %v695 = vmul.f32 %v479, %v694
    %v696 = vrcp.pop %v397
    %v697 = vmul.f32 %v397, %v696
    %v698 = vsub.f32 1.0, %v697
    %v699 = vmul.f32 %v696, %v698
    %v700 = vadd.f32 %v696, %v699
    %vm701 = vweird.f32 %v397
    %vm702 = vweird.f32 %v696
    %vm703 = vmor %vm701, %vm702
    %v704 = vsel %vm703, %v696, %v700
    %v705 = vand.u32 2147483647, %v397
    %vm706 = vcmp.eq.f32.partialorder %v705, 8.507059e+37
    %v707 = vand.u32 %v397, 2147483648
    %v708 = vor.u32 1.1754944e-38, %v707
    %v709 = vsel %vm706, %v708, %v704
    %v710 = vmul.f32 %v480, %v709
    %v711 = vrcp.pop %v399
    %v712 = vmul.f32 %v399, %v711
    %v713 = vsub.f32 1.0, %v712
    %v714 = vmul.f32 %v711, %v713
    %v715 = vadd.f32 %v711, %v714
    %vm716 = vweird.f32 %v399
    %vm717 = vweird.f32 %v711
    %vm718 = vmor %vm716, %vm717
    %v719 = vsel %vm718, %v711, %v715
    %v720 = vand.u32 2147483647, %v399
    %vm721 = vcmp.eq.f32.partialorder %v720, 8.507059e+37
    %v722 = vand.u32 %v399, 2147483648
    %v723 = vor.u32 1.1754944e-38, %v722
    %v724 = vsel %vm721, %v723, %v719
    %v725 = vmul.f32 %v481, %v724
    %v726 = vrcp.pop %v401
    %v727 = vmul.f32 %v401, %v726
    %v728 = vsub.f32 1.0, %v727
    %v729 = vmul.f32 %v726, %v728
    %v730 = vadd.f32 %v726, %v729
    %vm731 = vweird.f32 %v401
    %vm732 = vweird.f32 %v726
    %vm733 = vmor %vm731, %vm732
    %v734 = vsel %vm733, %v726, %v730
    %v735 = vand.u32 2147483647, %v401
    %vm736 = vcmp.eq.f32.partialorder %v735, 8.507059e+37
    %v737 = vand.u32 %v401, 2147483648
    %v738 = vor.u32 1.1754944e-38, %v737
    %v739 = vsel %vm736, %v738, %v734
    %v740 = vmul.f32 %v482, %v739
    %v741 = vrcp.pop %v403
    %v742 = vmul.f32 %v403, %v741
    %v743 = vsub.f32 1.0, %v742
    %v744 = vmul.f32 %v741, %v743
    %v745 = vadd.f32 %v741, %v744
    %vm746 = vweird.f32 %v403
    %vm747 = vweird.f32 %v741
    %vm748 = vmor %vm746, %vm747
    %v749 = vsel %vm748, %v741, %v745
    %v750 = vand.u32 2147483647, %v403
    %vm751 = vcmp.eq.f32.partialorder %v750, 8.507059e+37
    %v752 = vand.u32 %v403, 2147483648
    %v753 = vor.u32 1.1754944e-38, %v752
    %v754 = vsel %vm751, %v753, %v749
    %v755 = vmul.f32 %v483, %v754
    %v756 = vrcp.pop %v405
    %v757 = vmul.f32 %v405, %v756
    %v758 = vsub.f32 1.0, %v757
    %v759 = vmul.f32 %v756, %v758
    %v760 = vadd.f32 %v756, %v759
    %vm761 = vweird.f32 %v405
    %vm762 = vweird.f32 %v756
    %vm763 = vmor %vm761, %vm762
    %v764 = vsel %vm763, %v756, %v760
    %v765 = vand.u32 2147483647, %v405
    %vm766 = vcmp.eq.f32.partialorder %v765, 8.507059e+37
    %v767 = vand.u32 %v405, 2147483648
    %v768 = vor.u32 1.1754944e-38, %v767
    %v769 = vsel %vm766, %v768, %v764
    %v770 = vmul.f32 %v484, %v769
    %v771 = vrcp.pop %v407
    %v772 = vmul.f32 %v407, %v771
    %v773 = vsub.f32 1.0, %v772
    %v774 = vmul.f32 %v771, %v773
    %v775 = vadd.f32 %v771, %v774
    %vm776 = vweird.f32 %v407
    %vm777 = vweird.f32 %v771
    %vm778 = vmor %vm776, %vm777
    %v779 = vsel %vm778, %v771, %v775
    %v780 = vand.u32 2147483647, %v407
    %vm781 = vcmp.eq.f32.partialorder %v780, 8.507059e+37
    %v782 = vand.u32 %v407, 2147483648
    %v783 = vor.u32 1.1754944e-38, %v782
    %v784 = vsel %vm781, %v783, %v779
    %v785 = vmul.f32 %v485, %v784
    %v786 = vrcp.pop %v409
    %v787 = vmul.f32 %v409, %v786
    %v788 = vsub.f32 1.0, %v787
    %v789 = vmul.f32 %v786, %v788
    %v790 = vadd.f32 %v786, %v789
    %vm791 = vweird.f32 %v409
    %vm792 = vweird.f32 %v786
    %vm793 = vmor %vm791, %vm792
    %v794 = vsel %vm793, %v786, %v790
    %v795 = vand.u32 2147483647, %v409
    %vm796 = vcmp.eq.f32.partialorder %v795, 8.507059e+37
    %v797 = vand.u32 %v409, 2147483648
    %v798 = vor.u32 1.1754944e-38, %v797
    %v799 = vsel %vm796, %v798, %v794
    %v800 = vmul.f32 %v486, %v799
    %v801 = vrcp.pop %v411
    %v802 = vmul.f32 %v411, %v801
    %v803 = vsub.f32 1.0, %v802
    %v804 = vmul.f32 %v801, %v803
    %v805 = vadd.f32 %v801, %v804
    %vm806 = vweird.f32 %v411
    %vm807 = vweird.f32 %v801
    %vm808 = vmor %vm806, %vm807
    %v809 = vsel %vm808, %v801, %v805
    %v810 = vand.u32 2147483647, %v411
    %vm811 = vcmp.eq.f32.partialorder %v810, 8.507059e+37
    %v812 = vand.u32 %v411, 2147483648
    %v813 = vor.u32 1.1754944e-38, %v812
    %v814 = vsel %vm811, %v813, %v809
    %v815 = vmul.f32 %v487, %v814
    %v816 = vrcp.pop %v413
    %v817 = vmul.f32 %v413, %v816
    %v818 = vsub.f32 1.0, %v817
    %v819 = vmul.f32 %v816, %v818
    %v820 = vadd.f32 %v816, %v819
    %vm821 = vweird.f32 %v413
    %vm822 = vweird.f32 %v816
    %vm823 = vmor %vm821, %vm822
    %v824 = vsel %vm823, %v816, %v820
    %v825 = vand.u32 2147483647, %v413
    %vm826 = vcmp.eq.f32.partialorder %v825, 8.507059e+37
    %v827 = vand.u32 %v413, 2147483648
    %v828 = vor.u32 1.1754944e-38, %v827
    %v829 = vsel %vm826, %v828, %v824
    %v830 = vmul.f32 %v488, %v829
    %v831 = vrcp.pop %v415
    %v832 = vmul.f32 %v415, %v831
    %v833 = vsub.f32 1.0, %v832
    %v834 = vmul.f32 %v831, %v833
    %v835 = vadd.f32 %v831, %v834
    %vm836 = vweird.f32 %v415
    %vm837 = vweird.f32 %v831
    %vm838 = vmor %vm836, %vm837
    %v839 = vsel %vm838, %v831, %v835
    %v840 = vand.u32 2147483647, %v415
    %vm841 = vcmp.eq.f32.partialorder %v840, 8.507059e+37
    %v842 = vand.u32 %v415, 2147483648
    %v843 = vor.u32 1.1754944e-38, %v842
    %v844 = vsel %vm841, %v843, %v839
    %v845 = vmul.f32 %v489, %v844
    %v846 = vrcp.pop %v417
    %v847 = vmul.f32 %v417, %v846
    %v848 = vsub.f32 1.0, %v847
    %v849 = vmul.f32 %v846, %v848
    %v850 = vadd.f32 %v846, %v849
    %vm851 = vweird.f32 %v417
    %vm852 = vweird.f32 %v846
    %vm853 = vmor %vm851, %vm852
    %v854 = vsel %vm853, %v846, %v850
    %v855 = vand.u32 2147483647, %v417
    %vm856 = vcmp.eq.f32.partialorder %v855, 8.507059e+37
    %v857 = vand.u32 %v417, 2147483648
    %v858 = vor.u32 1.1754944e-38, %v857
    %v859 = vsel %vm856, %v858, %v854
    %v860 = vmul.f32 %v490, %v859
    %v861 = vrcp.pop %v419
    %v862 = vmul.f32 %v419, %v861
    %v863 = vsub.f32 1.0, %v862
    %v864 = vmul.f32 %v861, %v863
    %v865 = vadd.f32 %v861, %v864
    %vm866 = vweird.f32 %v419
    %vm867 = vweird.f32 %v861
    %vm868 = vmor %vm866, %vm867
    %v869 = vsel %vm868, %v861, %v865
    %v870 = vand.u32 2147483647, %v419
    %vm871 = vcmp.eq.f32.partialorder %v870, 8.507059e+37
    %v872 = vand.u32 %v419, 2147483648
    %v873 = vor.u32 1.1754944e-38, %v872
    %v874 = vsel %vm871, %v873, %v869
    %v875 = vmul.f32 %v491, %v874
    %v876 = vrcp.pop %v421
    %v877 = vmul.f32 %v421, %v876
    %v878 = vsub.f32 1.0, %v877
    %v879 = vmul.f32 %v876, %v878
    %v880 = vadd.f32 %v876, %v879
    %vm881 = vweird.f32 %v421
    %vm882 = vweird.f32 %v876
    %vm883 = vmor %vm881, %vm882
    %v884 = vsel %vm883, %v876, %v880
    %v885 = vand.u32 2147483647, %v421
    %vm886 = vcmp.eq.f32.partialorder %v885, 8.507059e+37
    %v887 = vand.u32 %v421, 2147483648
    %v888 = vor.u32 1.1754944e-38, %v887
    %v889 = vsel %vm886, %v888, %v884
    %v890 = vmul.f32 %v492, %v889
    %v891 = vrcp.pop %v423
    %v892 = vmul.f32 %v423, %v891
    %v893 = vsub.f32 1.0, %v892
    %v894 = vmul.f32 %v891, %v893
    %v895 = vadd.f32 %v891, %v894
    %vm896 = vweird.f32 %v423
    %vm897 = vweird.f32 %v891
    %vm898 = vmor %vm896, %vm897
    %v899 = vsel %vm898, %v891, %v895
    %v900 = vand.u32 2147483647, %v423
    %vm901 = vcmp.eq.f32.partialorder %v900, 8.507059e+37
    %v902 = vand.u32 %v423, 2147483648
    %v903 = vor.u32 1.1754944e-38, %v902
    %v904 = vsel %vm901, %v903, %v899
    %v905 = vmul.f32 %v493, %v904
    %v906 = vrcp.pop %v425
    %v907 = vmul.f32 %v425, %v906
    %v908 = vsub.f32 1.0, %v907
    %v909 = vmul.f32 %v906, %v908
    %v910 = vadd.f32 %v906, %v909
    %vm911 = vweird.f32 %v425
    %vm912 = vweird.f32 %v906
    %vm913 = vmor %vm911, %vm912
    %v914 = vsel %vm913, %v906, %v910
    %v915 = vand.u32 2147483647, %v425
    %vm916 = vcmp.eq.f32.partialorder %v915, 8.507059e+37
    %v917 = vand.u32 %v425, 2147483648
    %v918 = vor.u32 1.1754944e-38, %v917
    %v919 = vsel %vm916, %v918, %v914
    %v920 = vmul.f32 %v494, %v919
    %v921 = vrcp.pop %v427
    %v922 = vmul.f32 %v427, %v921
    %v923 = vsub.f32 1.0, %v922
    %v924 = vmul.f32 %v921, %v923
    %v925 = vadd.f32 %v921, %v924
    %vm926 = vweird.f32 %v427
    %vm927 = vweird.f32 %v921
    %vm928 = vmor %vm926, %vm927
    %v929 = vsel %vm928, %v921, %v925
    %v930 = vand.u32 2147483647, %v427
    %vm931 = vcmp.eq.f32.partialorder %v930, 8.507059e+37
    %v932 = vand.u32 %v427, 2147483648
    %v933 = vor.u32 1.1754944e-38, %v932
    %v934 = vsel %vm931, %v933, %v929
    %v935 = vmul.f32 %v495, %v934
    %v936 = vrcp.pop %v429
    %v937 = vmul.f32 %v429, %v936
    %v938 = vsub.f32 1.0, %v937
    %v939 = vmul.f32 %v936, %v938
    %v940 = vadd.f32 %v936, %v939
    %vm941 = vweird.f32 %v429
    %vm942 = vweird.f32 %v936
    %vm943 = vmor %vm941, %vm942
    %v944 = vsel %vm943, %v936, %v940
    %v945 = vand.u32 2147483647, %v429
    %vm946 = vcmp.eq.f32.partialorder %v945, 8.507059e+37
    %v947 = vand.u32 %v429, 2147483648
    %v948 = vor.u32 1.1754944e-38, %v947
    %v949 = vsel %vm946, %v948, %v944
    %v950 = vmul.f32 %v496, %v949
    %v951 = vrcp.pop %v431
    %v952 = vmul.f32 %v431, %v951
    %v953 = vsub.f32 1.0, %v952
    %v954 = vmul.f32 %v951, %v953
    %v955 = vadd.f32 %v951, %v954
    %vm956 = vweird.f32 %v431
    %vm957 = vweird.f32 %v951
    %vm958 = vmor %vm956, %vm957
    %v959 = vsel %vm958, %v951, %v955
    %v960 = vand.u32 2147483647, %v431
    %vm961 = vcmp.eq.f32.partialorder %v960, 8.507059e+37
    %v962 = vand.u32 %v431, 2147483648
    %v963 = vor.u32 1.1754944e-38, %v962
    %v964 = vsel %vm961, %v963, %v959
    %v965 = vmul.f32 %v497, %v964
    %v966 = vrcp.pop %v433
    %v967 = vmul.f32 %v433, %v966
    %v968 = vsub.f32 1.0, %v967
    %v969 = vmul.f32 %v966, %v968
    %v970 = vadd.f32 %v966, %v969
    %vm971 = vweird.f32 %v433
    %vm972 = vweird.f32 %v966
    %vm973 = vmor %vm971, %vm972
    %v974 = vsel %vm973, %v966, %v970
    %v975 = vand.u32 2147483647, %v433
    %vm976 = vcmp.eq.f32.partialorder %v975, 8.507059e+37
    %v977 = vand.u32 %v433, 2147483648
    %v978 = vor.u32 1.1754944e-38, %v977
    %v979 = vsel %vm976, %v978, %v974
    %v980 = vmul.f32 %v498, %v979
    %v981 = vrcp.pop %v435
    %v982 = vmul.f32 %v435, %v981
    %v983 = vsub.f32 1.0, %v982
    %v984 = vmul.f32 %v981, %v983
    %v985 = vadd.f32 %v981, %v984
    %vm986 = vweird.f32 %v435
    %vm987 = vweird.f32 %v981
    %vm988 = vmor %vm986, %vm987
    %v989 = vsel %vm988, %v981, %v985
    %v990 = vand.u32 2147483647, %v435
    %vm991 = vcmp.eq.f32.partialorder %v990, 8.507059e+37
    %v992 = vand.u32 %v435, 2147483648
    %v993 = vor.u32 1.1754944e-38, %v992
    %v994 = vsel %vm991, %v993, %v989
    %v995 = vmul.f32 %v499, %v994
    %v996 = vrcp.pop %v437
    %v997 = vmul.f32 %v437, %v996
    %v998 = vsub.f32 1.0, %v997
    %v999 = vmul.f32 %v996, %v998
    %v1000 = vadd.f32 %v996, %v999
    %vm1001 = vweird.f32 %v437
    %vm1002 = vweird.f32 %v996
    %vm1003 = vmor %vm1001, %vm1002
    %v1004 = vsel %vm1003, %v996, %v1000
    %v1005 = vand.u32 2147483647, %v437
    %vm1006 = vcmp.eq.f32.partialorder %v1005, 8.507059e+37
    %v1007 = vand.u32 %v437, 2147483648
    %v1008 = vor.u32 1.1754944e-38, %v1007
    %v1009 = vsel %vm1006, %v1008, %v1004
    %v1010 = vmul.f32 %v500, %v1009
    %v1011 = vrcp.pop %v439
    %v1012 = vmul.f32 %v439, %v1011
    %v1013 = vsub.f32 1.0, %v1012
    %v1014 = vmul.f32 %v1011, %v1013
    %v1015 = vadd.f32 %v1011, %v1014
    %vm1016 = vweird.f32 %v439
    %vm1017 = vweird.f32 %v1011
    %vm1018 = vmor %vm1016, %vm1017
    %v1019 = vsel %vm1018, %v1011, %v1015
    %v1020 = vand.u32 2147483647, %v439
    %vm1021 = vcmp.eq.f32.partialorder %v1020, 8.507059e+37
    %v1022 = vand.u32 %v439, 2147483648
    %v1023 = vor.u32 1.1754944e-38, %v1022
    %v1024 = vsel %vm1021, %v1023, %v1019
    %v1025 = vmul.f32 %v501, %v1024
    %v1026 = vrcp.pop %v441
    %v1027 = vmul.f32 %v441, %v1026
    %v1028 = vsub.f32 1.0, %v1027
    %v1029 = vmul.f32 %v1026, %v1028
    %v1030 = vadd.f32 %v1026, %v1029
    %vm1031 = vweird.f32 %v441
    %vm1032 = vweird.f32 %v1026
    %vm1033 = vmor %vm1031, %vm1032
    %v1034 = vsel %vm1033, %v1026, %v1030
    %v1035 = vand.u32 2147483647, %v441
    %vm1036 = vcmp.eq.f32.partialorder %v1035, 8.507059e+37
    %v1037 = vand.u32 %v441, 2147483648
    %v1038 = vor.u32 1.1754944e-38, %v1037
    %v1039 = vsel %vm1036, %v1038, %v1034
    %v1040 = vmul.f32 %v502, %v1039
    %v1041 = vrcp.pop %v443
    %v1042 = vmul.f32 %v443, %v1041
    %v1043 = vsub.f32 1.0, %v1042
    %v1044 = vmul.f32 %v1041, %v1043
    %v1045 = vadd.f32 %v1041, %v1044
    %vm1046 = vweird.f32 %v443
    %vm1047 = vweird.f32 %v1041
    %vm1048 = vmor %vm1046, %vm1047
    %v1049 = vsel %vm1048, %v1041, %v1045
    %v1050 = vand.u32 2147483647, %v443
    %vm1051 = vcmp.eq.f32.partialorder %v1050, 8.507059e+37
    %v1052 = vand.u32 %v443, 2147483648
    %v1053 = vor.u32 1.1754944e-38, %v1052
    %v1054 = vsel %vm1051, %v1053, %v1049
    %v1055 = vmul.f32 %v503, %v1054
    %v1056 = vrcp.pop %v445
    %v1057 = vmul.f32 %v445, %v1056
    %v1058 = vsub.f32 1.0, %v1057
    %v1059 = vmul.f32 %v1056, %v1058
    %v1060 = vadd.f32 %v1056, %v1059
    %vm1061 = vweird.f32 %v445
    %vm1062 = vweird.f32 %v1056
    %vm1063 = vmor %vm1061, %vm1062
    %v1064 = vsel %vm1063, %v1056, %v1060
    %v1065 = vand.u32 2147483647, %v445
    %vm1066 = vcmp.eq.f32.partialorder %v1065, 8.507059e+37
    %v1067 = vand.u32 %v445, 2147483648
    %v1068 = vor.u32 1.1754944e-38, %v1067
    %v1069 = vsel %vm1066, %v1068, %v1064
    %v1070 = vmul.f32 %v504, %v1069
    %v1071 = vrcp.pop %v447
    %v1072 = vmul.f32 %v447, %v1071
    %v1073 = vsub.f32 1.0, %v1072
    %v1074 = vmul.f32 %v1071, %v1073
    %v1075 = vadd.f32 %v1071, %v1074
    %vm1076 = vweird.f32 %v447
    %vm1077 = vweird.f32 %v1071
    %vm1078 = vmor %vm1076, %vm1077
    %v1079 = vsel %vm1078, %v1071, %v1075
    %v1080 = vand.u32 2147483647, %v447
    %vm1081 = vcmp.eq.f32.partialorder %v1080, 8.507059e+37
    %v1082 = vand.u32 %v447, 2147483648
    %v1083 = vor.u32 1.1754944e-38, %v1082
    %v1084 = vsel %vm1081, %v1083, %v1079
    %v1085 = vmul.f32 %v505, %v1084
    %v1086 = vrcp.pop %v449
    %v1087 = vmul.f32 %v449, %v1086
    %v1088 = vsub.f32 1.0, %v1087
    %v1089 = vmul.f32 %v1086, %v1088
    %v1090 = vadd.f32 %v1086, %v1089
    %vm1091 = vweird.f32 %v449
    %vm1092 = vweird.f32 %v1086
    %vm1093 = vmor %vm1091, %vm1092
    %v1094 = vsel %vm1093, %v1086, %v1090
    %v1095 = vand.u32 2147483647, %v449
    %vm1096 = vcmp.eq.f32.partialorder %v1095, 8.507059e+37
    %v1097 = vand.u32 %v449, 2147483648
    %v1098 = vor.u32 1.1754944e-38, %v1097
    %v1099 = vsel %vm1096, %v1098, %v1094
    %v1100 = vmul.f32 %v506, %v1099
    %v1101 = vrcp.pop %v451
    %v1102 = vmul.f32 %v451, %v1101
    %v1103 = vsub.f32 1.0, %v1102
    %v1104 = vmul.f32 %v1101, %v1103
    %v1105 = vadd.f32 %v1101, %v1104
    %vm1106 = vweird.f32 %v451
    %vm1107 = vweird.f32 %v1101
    %vm1108 = vmor %vm1106, %vm1107
    %v1109 = vsel %vm1108, %v1101, %v1105
    %v1110 = vand.u32 2147483647, %v451
    %vm1111 = vcmp.eq.f32.partialorder %v1110, 8.507059e+37
    %v1112 = vand.u32 %v451, 2147483648
    %v1113 = vor.u32 1.1754944e-38, %v1112
    %v1114 = vsel %vm1111, %v1113, %v1109
    %v1115 = vmul.f32 %v507, %v1114
    %v1116 = vrcp.pop %v453
    %v1117 = vmul.f32 %v453, %v1116
    %v1118 = vsub.f32 1.0, %v1117
    %v1119 = vmul.f32 %v1116, %v1118
    %v1120 = vadd.f32 %v1116, %v1119
    %vm1121 = vweird.f32 %v453
    %vm1122 = vweird.f32 %v1116
    %vm1123 = vmor %vm1121, %vm1122
    %v1124 = vsel %vm1123, %v1116, %v1120
    %v1125 = vand.u32 2147483647, %v453
    %vm1126 = vcmp.eq.f32.partialorder %v1125, 8.507059e+37
    %v1127 = vand.u32 %v453, 2147483648
    %v1128 = vor.u32 1.1754944e-38, %v1127
    %v1129 = vsel %vm1126, %v1128, %v1124
    %v1130 = vmul.f32 %v508, %v1129
    %v1131 = vrcp.pop %v455
    %v1132 = vmul.f32 %v455, %v1131
    %v1133 = vsub.f32 1.0, %v1132
    %v1134 = vmul.f32 %v1131, %v1133
    %v1135 = vadd.f32 %v1131, %v1134
    %vm1136 = vweird.f32 %v455
    %vm1137 = vweird.f32 %v1131
    %vm1138 = vmor %vm1136, %vm1137
    %v1139 = vsel %vm1138, %v1131, %v1135
    %v1140 = vand.u32 2147483647, %v455
    %vm1141 = vcmp.eq.f32.partialorder %v1140, 8.507059e+37
    %v1142 = vand.u32 %v455, 2147483648
    %v1143 = vor.u32 1.1754944e-38, %v1142
    %v1144 = vsel %vm1141, %v1143, %v1139
    %v1145 = vmul.f32 %v509, %v1144
    %v1146 = vrcp.pop %v457
    %v1147 = vmul.f32 %v457, %v1146
    %v1148 = vsub.f32 1.0, %v1147
    %v1149 = vmul.f32 %v1146, %v1148
    %v1150 = vadd.f32 %v1146, %v1149
    %vm1151 = vweird.f32 %v457
    %vm1152 = vweird.f32 %v1146
    %vm1153 = vmor %vm1151, %vm1152
    %v1154 = vsel %vm1153, %v1146, %v1150
    %v1155 = vand.u32 2147483647, %v457
    %vm1156 = vcmp.eq.f32.partialorder %v1155, 8.507059e+37
    %v1157 = vand.u32 %v457, 2147483648
    %v1158 = vor.u32 1.1754944e-38, %v1157
    %v1159 = vsel %vm1156, %v1158, %v1154
    %v1160 = vmul.f32 %v510, %v1159
    %v1161 = vrcp.pop %v459
    %v1162 = vmul.f32 %v459, %v1161
    %v1163 = vsub.f32 1.0, %v1162
    %v1164 = vmul.f32 %v1161, %v1163
    %v1165 = vadd.f32 %v1161, %v1164
    %vm1166 = vweird.f32 %v459
    %vm1167 = vweird.f32 %v1161
    %vm1168 = vmor %vm1166, %vm1167
    %v1169 = vsel %vm1168, %v1161, %v1165
    %v1170 = vand.u32 2147483647, %v459
    %vm1171 = vcmp.eq.f32.partialorder %v1170, 8.507059e+37
    %v1172 = vand.u32 %v459, 2147483648
    %v1173 = vor.u32 1.1754944e-38, %v1172
    %v1174 = vsel %vm1171, %v1173, %v1169
    %v1175 = vmul.f32 %v511, %v1174
    %v1176 = vrcp.pop %v461
    %v1177 = vmul.f32 %v461, %v1176
    %v1178 = vsub.f32 1.0, %v1177
    %v1179 = vmul.f32 %v1176, %v1178
    %v1180 = vadd.f32 %v1176, %v1179
    %vm1181 = vweird.f32 %v461
    %vm1182 = vweird.f32 %v1176
    %vm1183 = vmor %vm1181, %vm1182
    %v1184 = vsel %vm1183, %v1176, %v1180
    %v1185 = vand.u32 2147483647, %v461
    %vm1186 = vcmp.eq.f32.partialorder %v1185, 8.507059e+37
    %v1187 = vand.u32 %v461, 2147483648
    %v1188 = vor.u32 1.1754944e-38, %v1187
    %v1189 = vsel %vm1186, %v1188, %v1184
    %v1190 = vmul.f32 %v512, %v1189
    %v1191 = vrcp.pop %v463
    %v1192 = vmul.f32 %v463, %v1191
    %v1193 = vsub.f32 1.0, %v1192
    %v1194 = vmul.f32 %v1191, %v1193
    %v1195 = vadd.f32 %v1191, %v1194
    %vm1196 = vweird.f32 %v463
    %vm1197 = vweird.f32 %v1191
    %vm1198 = vmor %vm1196, %vm1197
    %v1199 = vsel %vm1198, %v1191, %v1195
    %v1200 = vand.u32 2147483647, %v463
    %vm1201 = vcmp.eq.f32.partialorder %v1200, 8.507059e+37
    %v1202 = vand.u32 %v463, 2147483648
    %v1203 = vor.u32 1.1754944e-38, %v1202
    %v1204 = vsel %vm1201, %v1203, %v1199
    %v1205 = vmul.f32 %v513, %v1204
    %v1206 = vrcp.pop %v465
    %v1207 = vmul.f32 %v465, %v1206
    %v1208 = vsub.f32 1.0, %v1207
    %v1209 = vmul.f32 %v1206, %v1208
    %v1210 = vadd.f32 %v1206, %v1209
    %vm1211 = vweird.f32 %v465
    %vm1212 = vweird.f32 %v1206
    %vm1213 = vmor %vm1211, %vm1212
    %v1214 = vsel %vm1213, %v1206, %v1210
    %v1215 = vand.u32 2147483647, %v465
    %vm1216 = vcmp.eq.f32.partialorder %v1215, 8.507059e+37
    %v1217 = vand.u32 %v465, 2147483648
    %v1218 = vor.u32 1.1754944e-38, %v1217
    %v1219 = vsel %vm1216, %v1218, %v1214
    %v1220 = vmul.f32 %v514, %v1219
    %v1221 = vrcp.pop %v467
    %v1222 = vmul.f32 %v467, %v1221
    %v1223 = vsub.f32 1.0, %v1222
    %v1224 = vmul.f32 %v1221, %v1223
    %v1225 = vadd.f32 %v1221, %v1224
    %vm1226 = vweird.f32 %v467
    %vm1227 = vweird.f32 %v1221
    %vm1228 = vmor %vm1226, %vm1227
    %v1229 = vsel %vm1228, %v1221, %v1225
    %v1230 = vand.u32 2147483647, %v467
    %vm1231 = vcmp.eq.f32.partialorder %v1230, 8.507059e+37
    %v1232 = vand.u32 %v467, 2147483648
    %v1233 = vor.u32 1.1754944e-38, %v1232
    %v1234 = vsel %vm1231, %v1233, %v1229
    %v1235 = vmul.f32 %v515, %v1234
    %1237 = vset.pattern.permute.xlu0 0
    %1238 = vperm.xlu0 %1237, %v530
    %v1239 = vpop.permute.xlu0 %1238
    %1242 = vset.pattern.permute.xlu0 0
    %1243 = vperm.xlu0 %1242, %v545
    %v1244 = vpop.permute.xlu0 %1243
    %1247 = vset.pattern.permute.xlu0 0
    %1248 = vperm.xlu0 %1247, %v560
    %v1249 = vpop.permute.xlu0 %1248
    %1252 = vset.pattern.permute.xlu0 0
    %1253 = vperm.xlu0 %1252, %v575
    %v1254 = vpop.permute.xlu0 %1253
    %1257 = vset.pattern.permute.xlu0 0
    %1258 = vperm.xlu0 %1257, %v590
    %v1259 = vpop.permute.xlu0 %1258
    %1262 = vset.pattern.permute.xlu0 0
    %1263 = vperm.xlu0 %1262, %v605
    %v1264 = vpop.permute.xlu0 %1263
    %1267 = vset.pattern.permute.xlu0 0
    %1268 = vperm.xlu0 %1267, %v620
    %v1269 = vpop.permute.xlu0 %1268
    %1272 = vset.pattern.permute.xlu0 0
    %1273 = vperm.xlu0 %1272, %v635
    %v1274 = vpop.permute.xlu0 %1273
    %1277 = vset.pattern.permute.xlu0 0
    %1278 = vperm.xlu0 %1277, %v650
    %v1279 = vpop.permute.xlu0 %1278
    %1282 = vset.pattern.permute.xlu0 0
    %1283 = vperm.xlu0 %1282, %v665
    %v1284 = vpop.permute.xlu0 %1283
    %1287 = vset.pattern.permute.xlu0 0
    %1288 = vperm.xlu0 %1287, %v680
    %v1289 = vpop.permute.xlu0 %1288
    %1292 = vset.pattern.permute.xlu0 0
    %1293 = vperm.xlu0 %1292, %v695
    %v1294 = vpop.permute.xlu0 %1293
    %1297 = vset.pattern.permute.xlu0 0
    %1298 = vperm.xlu0 %1297, %v710
    %v1299 = vpop.permute.xlu0 %1298
    %1302 = vset.pattern.permute.xlu0 0
    %1303 = vperm.xlu0 %1302, %v725
    %v1304 = vpop.permute.xlu0 %1303
    %1307 = vset.pattern.permute.xlu0 0
    %1308 = vperm.xlu0 %1307, %v740
    %v1309 = vpop.permute.xlu0 %1308
    %1312 = vset.pattern.permute.xlu0 0
    %1313 = vperm.xlu0 %1312, %v755
    %v1314 = vpop.permute.xlu0 %1313
    %1317 = vset.pattern.permute.xlu0 0
    %1318 = vperm.xlu0 %1317, %v770
    %v1319 = vpop.permute.xlu0 %1318
    %1322 = vset.pattern.permute.xlu0 0
    %1323 = vperm.xlu0 %1322, %v785
    %v1324 = vpop.permute.xlu0 %1323
    %1327 = vset.pattern.permute.xlu0 0
    %1328 = vperm.xlu0 %1327, %v800
    %v1329 = vpop.permute.xlu0 %1328
    %1332 = vset.pattern.permute.xlu0 0
    %1333 = vperm.xlu0 %1332, %v815
    %v1334 = vpop.permute.xlu0 %1333
    %1337 = vset.pattern.permute.xlu0 0
    %1338 = vperm.xlu0 %1337, %v830
    %v1339 = vpop.permute.xlu0 %1338
    %1342 = vset.pattern.permute.xlu0 0
    %1343 = vperm.xlu0 %1342, %v845
    %v1344 = vpop.permute.xlu0 %1343
    %1347 = vset.pattern.permute.xlu0 0
    %1348 = vperm.xlu0 %1347, %v860
    %v1349 = vpop.permute.xlu0 %1348
    %1352 = vset.pattern.permute.xlu0 0
    %1353 = vperm.xlu0 %1352, %v875
    %v1354 = vpop.permute.xlu0 %1353
    %1357 = vset.pattern.permute.xlu0 0
    %1358 = vperm.xlu0 %1357, %v890
    %v1359 = vpop.permute.xlu0 %1358
    %1362 = vset.pattern.permute.xlu0 0
    %1363 = vperm.xlu0 %1362, %v905
    %v1364 = vpop.permute.xlu0 %1363
    %1367 = vset.pattern.permute.xlu0 0
    %1368 = vperm.xlu0 %1367, %v920
    %v1369 = vpop.permute.xlu0 %1368
    %1372 = vset.pattern.permute.xlu0 0
    %1373 = vperm.xlu0 %1372, %v935
    %v1374 = vpop.permute.xlu0 %1373
    %1377 = vset.pattern.permute.xlu0 0
    %1378 = vperm.xlu0 %1377, %v950
    %v1379 = vpop.permute.xlu0 %1378
    %1382 = vset.pattern.permute.xlu0 0
    %1383 = vperm.xlu0 %1382, %v965
    %v1384 = vpop.permute.xlu0 %1383
    %1387 = vset.pattern.permute.xlu0 0
    %1388 = vperm.xlu0 %1387, %v980
    %v1389 = vpop.permute.xlu0 %1388
    %1392 = vset.pattern.permute.xlu0 0
    %1393 = vperm.xlu0 %1392, %v995
    %v1394 = vpop.permute.xlu0 %1393
    %1397 = vset.pattern.permute.xlu0 0
    %1398 = vperm.xlu0 %1397, %v1010
    %v1399 = vpop.permute.xlu0 %1398
    %1402 = vset.pattern.permute.xlu0 0
    %1403 = vperm.xlu0 %1402, %v1025
    %v1404 = vpop.permute.xlu0 %1403
    %1407 = vset.pattern.permute.xlu0 0
    %1408 = vperm.xlu0 %1407, %v1040
    %v1409 = vpop.permute.xlu0 %1408
    %1412 = vset.pattern.permute.xlu0 0
    %1413 = vperm.xlu0 %1412, %v1055
    %v1414 = vpop.permute.xlu0 %1413
    %1417 = vset.pattern.permute.xlu0 0
    %1418 = vperm.xlu0 %1417, %v1070
    %v1419 = vpop.permute.xlu0 %1418
    %1422 = vset.pattern.permute.xlu0 0
    %1423 = vperm.xlu0 %1422, %v1085
    %v1424 = vpop.permute.xlu0 %1423
    %1427 = vset.pattern.permute.xlu0 0
    %1428 = vperm.xlu0 %1427, %v1100
    %v1429 = vpop.permute.xlu0 %1428
    %1432 = vset.pattern.permute.xlu0 0
    %1433 = vperm.xlu0 %1432, %v1115
    %v1434 = vpop.permute.xlu0 %1433
    %1437 = vset.pattern.permute.xlu0 0
    %1438 = vperm.xlu0 %1437, %v1130
    %v1439 = vpop.permute.xlu0 %1438
    %1442 = vset.pattern.permute.xlu0 0
    %1443 = vperm.xlu0 %1442, %v1145
    %v1444 = vpop.permute.xlu0 %1443
    %1447 = vset.pattern.permute.xlu0 0
    %1448 = vperm.xlu0 %1447, %v1160
    %v1449 = vpop.permute.xlu0 %1448
    %1452 = vset.pattern.permute.xlu0 0
    %1453 = vperm.xlu0 %1452, %v1175
    %v1454 = vpop.permute.xlu0 %1453
    %1457 = vset.pattern.permute.xlu0 0
    %1458 = vperm.xlu0 %1457, %v1190
    %v1459 = vpop.permute.xlu0 %1458
    %1462 = vset.pattern.permute.xlu0 0
    %1463 = vperm.xlu0 %1462, %v1205
    %v1464 = vpop.permute.xlu0 %1463
    %1467 = vset.pattern.permute.xlu0 0
    %1468 = vperm.xlu0 %1467, %v1220
    %v1469 = vpop.permute.xlu0 %1468
    %1472 = vset.pattern.permute.xlu0 0
    %1473 = vperm.xlu0 %1472, %v1235
    %v1474 = vpop.permute.xlu0 %1473
    %v1476 = vmul.f32 %v277, %v1239
    %v1477 = vmul.f32 %v279, %v1244
    %v1478 = vmul.f32 %v281, %v1249
    %v1479 = vmul.f32 %v283, %v1254
    %v1480 = vmul.f32 %v285, %v1259
    %v1481 = vmul.f32 %v287, %v1264
    %v1482 = vmul.f32 %v289, %v1269
    %v1483 = vmul.f32 %v291, %v1274
    %v1484 = vmul.f32 %v293, %v1279
    %v1485 = vmul.f32 %v295, %v1284
    %v1486 = vmul.f32 %v297, %v1289
    %v1487 = vmul.f32 %v299, %v1294
    %v1488 = vmul.f32 %v301, %v1299
    %v1489 = vmul.f32 %v303, %v1304
    %v1490 = vmul.f32 %v305, %v1309
    %v1491 = vmul.f32 %v307, %v1314
    %v1492 = vmul.f32 %v309, %v1319
    %v1493 = vmul.f32 %v311, %v1324
    %v1494 = vmul.f32 %v313, %v1329
    %v1495 = vmul.f32 %v315, %v1334
    %v1496 = vmul.f32 %v317, %v1339
    %v1497 = vmul.f32 %v319, %v1344
    %v1498 = vmul.f32 %v321, %v1349
    %v1499 = vmul.f32 %v323, %v1354
    %v1500 = vmul.f32 %v325, %v1359
    %v1501 = vmul.f32 %v327, %v1364
    %v1502 = vmul.f32 %v329, %v1369
    %v1503 = vmul.f32 %v331, %v1374
    %v1504 = vmul.f32 %v333, %v1379
    %v1505 = vmul.f32 %v335, %v1384
    %v1506 = vmul.f32 %v337, %v1389
    %v1507 = vmul.f32 %v339, %v1394
    %v1508 = vmul.f32 %v341, %v1399
    %v1509 = vmul.f32 %v343, %v1404
    %v1510 = vmul.f32 %v345, %v1409
    %v1511 = vmul.f32 %v347, %v1414
    %v1512 = vmul.f32 %v349, %v1419
    %v1513 = vmul.f32 %v351, %v1424
    %v1514 = vmul.f32 %v353, %v1429
    %v1515 = vmul.f32 %v355, %v1434
    %v1516 = vmul.f32 %v357, %v1439
    %v1517 = vmul.f32 %v359, %v1444
    %v1518 = vmul.f32 %v361, %v1449
    %v1519 = vmul.f32 %v363, %v1454
    %v1520 = vmul.f32 %v365, %v1459
    %v1521 = vmul.f32 %v367, %v1464
    %v1522 = vmul.f32 %v369, %v1469
    %v1523 = vmul.f32 %v371, %v1474
    %1524 = vst [vmem:[#allocation5] sm:$0xff] %v1476
    %1525 = vst [vmem:[#allocation5 + $0x8] sm:$0xff] %v1477
    %1526 = vst [vmem:[#allocation5 + $0x10] sm:$0xff] %v1478
    %1527 = vst [vmem:[#allocation5 + $0x18] sm:$0xff] %v1479
    %1528 = vst [vmem:[#allocation5 + $0x20] sm:$0xff] %v1480
    %1529 = vst [vmem:[#allocation5 + $0x28] sm:$0xff] %v1481
    %1530 = vst [vmem:[#allocation5 + $0x30] sm:$0xff] %v1482
    %1531 = vst [vmem:[#allocation5 + $0x38] sm:$0xff] %v1483
    %1532 = vst [vmem:[#allocation5 + $0x40] sm:$0xff] %v1484
    %1533 = vst [vmem:[#allocation5 + $0x48] sm:$0xff] %v1485
    %1534 = vst [vmem:[#allocation5 + $0x50] sm:$0xff] %v1486
    %1535 = vst [vmem:[#allocation5 + $0x58] sm:$0xff] %v1487
    %1536 = vst [vmem:[#allocation5 + $0x60] sm:$0xff] %v1488
    %1537 = vst [vmem:[#allocation5 + $0x68] sm:$0xff] %v1489
    %1538 = vst [vmem:[#allocation5 + $0x70] sm:$0xff] %v1490
    %1539 = vst [vmem:[#allocation5 + $0x78] sm:$0xff] %v1491
    %1540 = vst [vmem:[#allocation5 + $0x80] sm:$0xff] %v1492
    %1541 = vst [vmem:[#allocation5 + $0x88] sm:$0xff] %v1493
    %1542 = vst [vmem:[#allocation5 + $0x90] sm:$0xff] %v1494
    %1543 = vst [vmem:[#allocation5 + $0x98] sm:$0xff] %v1495
    %1544 = vst [vmem:[#allocation5 + $0xa0] sm:$0xff] %v1496
    %1545 = vst [vmem:[#allocation5 + $0xa8] sm:$0xff] %v1497
    %1546 = vst [vmem:[#allocation5 + $0xb0] sm:$0xff] %v1498
    %1547 = vst [vmem:[#allocation5 + $0xb8] sm:$0xff] %v1499
    %1548 = vst [vmem:[#allocation5 + $0xc0] sm:$0xff] %v1500
    %1549 = vst [vmem:[#allocation5 + $0xc8] sm:$0xff] %v1501
    %1550 = vst [vmem:[#allocation5 + $0xd0] sm:$0xff] %v1502
    %1551 = vst [vmem:[#allocation5 + $0xd8] sm:$0xff] %v1503
    %1552 = vst [vmem:[#allocation5 + $0xe0] sm:$0xff] %v1504
    %1553 = vst [vmem:[#allocation5 + $0xe8] sm:$0xff] %v1505
    %1554 = vst [vmem:[#allocation5 + $0xf0] sm:$0xff] %v1506
    %1555 = vst [vmem:[#allocation5 + $0xf8] sm:$0xff] %v1507
    %1556 = vst [vmem:[#allocation5 + $0x100] sm:$0xff] %v1508
    %1557 = vst [vmem:[#allocation5 + $0x108] sm:$0xff] %v1509
    %1558 = vst [vmem:[#allocation5 + $0x110] sm:$0xff] %v1510
    %1559 = vst [vmem:[#allocation5 + $0x118] sm:$0xff] %v1511
    %1560 = vst [vmem:[#allocation5 + $0x120] sm:$0xff] %v1512
    %1561 = vst [vmem:[#allocation5 + $0x128] sm:$0xff] %v1513
    %1562 = vst [vmem:[#allocation5 + $0x130] sm:$0xff] %v1514
    %1563 = vst [vmem:[#allocation5 + $0x138] sm:$0xff] %v1515
    %1564 = vst [vmem:[#allocation5 + $0x140] sm:$0xff] %v1516
    %1565 = vst [vmem:[#allocation5 + $0x148] sm:$0xff] %v1517
    %1566 = vst [vmem:[#allocation5 + $0x150] sm:$0xff] %v1518
    %1567 = vst [vmem:[#allocation5 + $0x158] sm:$0xff] %v1519
    %1568 = vst [vmem:[#allocation5 + $0x160] sm:$0xff] %v1520
    %1569 = vst [vmem:[#allocation5 + $0x168] sm:$0xff] %v1521
    %1570 = vst [vmem:[#allocation5 + $0x170] sm:$0xff] %v1522
    %1571 = vst [vmem:[#allocation5 + $0x178] sm:$0xff] %v1523
    %p1572 = scmp.eq.s32.totalorder 0, 0
    // Predicated region
    $region18: #{tpu_custom_call.1} parent=1 // pred_check
      %p1573 = pneg %p1572
    $region19: #{tpu_custom_call.1} parent=1 // pred_check_branch
      %1575 = sbr.rel (%p1573) target = $region21
    $region20: #{tpu_custom_call.1} parent=1 // pred_region
      %1576 = vst [vmem:[#allocation6] sm:$0xff] 0.0
    $region21: #{tpu_custom_call.1} parent=1 // pred_fallthru
      _
    %v1577 = vld [vmem:[#allocation6] sm:$0xff]
    %v1578 = vld [vmem:[#allocation2] sm:$0xff]
    %v1579 = vld [vmem:[#allocation2 + $0x8] sm:$0xff]
    %v1580 = vld [vmem:[#allocation2 + $0x10] sm:$0xff]
    %1581 = vmatpush.msra.mxu0 %v1491
    %1582 = vmatpush.msra.mxu0 %v1490
    %1583 = vmatpush.msra.mxu0 %v1489
    %1584 = vmatpush.msra.mxu0 %v1488
    %1585 = vmatpush.msra.mxu0 %v1487
    %1586 = vmatpush.msra.mxu0 %v1486
    %1587 = vmatpush.msra.mxu0 %v1485
    %1588 = vmatpush.msra.mxu0 %v1484
    %1589 = vmatpush.msra.mxu0 %v1483
    %1590 = vmatpush.msra.mxu0 %v1482
    %1591 = vmatpush.msra.mxu0 %v1481
    %1592 = vmatpush.msra.mxu0 %v1480
    %1593 = vmatpush.msra.mxu0 %v1479
    %1594 = vmatpush.msra.mxu0 %v1478
    %1595 = vmatpush.msra.mxu0 %v1477
    %1596 = vmatpush.msra.mxu0 %v1476
    %1597 = vmatmul.f32.gmra.mxu0 %v1578
    %v1598 = vpop.f32.mrf.mxu0
    %v1599 = vadd.f32 0.0, %v1598
    %1600 = vdwg.mxu0
    %1601 = vmatpush.msra.mxu0 %v1507
    %1602 = vmatpush.msra.mxu0 %v1506
    %1603 = vmatpush.msra.mxu0 %v1505
    %1604 = vmatpush.msra.mxu0 %v1504
    %1605 = vmatpush.msra.mxu0 %v1503
    %1606 = vmatpush.msra.mxu0 %v1502
    %1607 = vmatpush.msra.mxu0 %v1501
    %1608 = vmatpush.msra.mxu0 %v1500
    %1609 = vmatpush.msra.mxu0 %v1499
    %1610 = vmatpush.msra.mxu0 %v1498
    %1611 = vmatpush.msra.mxu0 %v1497
    %1612 = vmatpush.msra.mxu0 %v1496
    %1613 = vmatpush.msra.mxu0 %v1495
    %1614 = vmatpush.msra.mxu0 %v1494
    %1615 = vmatpush.msra.mxu0 %v1493
    %1616 = vmatpush.msra.mxu0 %v1492
    %1617 = vmatmul.f32.gmra.mxu0 %v1579
    %v1618 = vpop.f32.mrf.mxu0
    %v1619 = vadd.f32 %v1599, %v1618
    %1620 = vdwg.mxu0
    %1621 = vmatpush.msra.mxu0 %v1523
    %1622 = vmatpush.msra.mxu0 %v1522
    %1623 = vmatpush.msra.mxu0 %v1521
    %1624 = vmatpush.msra.mxu0 %v1520
    %1625 = vmatpush.msra.mxu0 %v1519
    %1626 = vmatpush.msra.mxu0 %v1518
    %1627 = vmatpush.msra.mxu0 %v1517
    %1628 = vmatpush.msra.mxu0 %v1516
    %1629 = vmatpush.msra.mxu0 %v1515
    %1630 = vmatpush.msra.mxu0 %v1514
    %1631 = vmatpush.msra.mxu0 %v1513
    %1632 = vmatpush.msra.mxu0 %v1512
    %1633 = vmatpush.msra.mxu0 %v1511
    %1634 = vmatpush.msra.mxu0 %v1510
    %1635 = vmatpush.msra.mxu0 %v1509
    %1636 = vmatpush.msra.mxu0 %v1508
    %1637 = vmatmul.f32.gmra.mxu0 %v1580
    %v1638 = vpop.f32.mrf.mxu0
    %v1639 = vadd.f32 %v1619, %v1638
    %1640 = vdwg.mxu0
    %v1641 = vadd.f32 %v1577, %v1639
    %1642 = vst [vmem:[#allocation6] sm:$0xff] %v1641
    // Predicated region
    $region22: #{tpu_custom_call.1} parent=1 // pred_check
      _
    $region23: #{tpu_custom_call.1} parent=1 // pred_check_branch
      %1644 = sbr.rel (0) target = $region25
    $region24: #{tpu_custom_call.1} parent=1 // pred_region
      %s1645 = sadd.s32 0, 0
      %s1646 = smul.u32 48, %s1645
      %1648 = vsyncadd [#allocation4], 0
      %s1649 = smul.addr %s1646, 8
      %s1650 = scalar_lea.hbm %s3, %s1649
      %s1651 = sshll.u32 [#allocation5], 4
      %s1652 = int_to_ptr.vmem [resolvable:$true] %s1651
      %s1653 = sshll.u32 %s1650, 4
      %s1654 = int_to_ptr.hbm [resolvable:$true] %s1653
      %1659 = dma.vmem_to_hbm [thread:$0]  %s1652, 6144, %s1654, [#allocation4], 128, 128, 8
    $region25: #{tpu_custom_call.1} parent=1 // pred_fallthru
      _
    // Predicated region
    $region26: #{tpu_custom_call.1} parent=1 // pred_check
      _
    $region27: #{tpu_custom_call.1} parent=1 // pred_check_branch
      %1661 = sbr.rel (0) target = $region29
    $region28: #{tpu_custom_call.1} parent=1 // pred_region
      %1663 = vsyncadd [#allocation7], 0
      %s1665 = sshll.u32 [#allocation6], 4
      %s1666 = int_to_ptr.vmem [resolvable:$true] %s1665
      %s1667 = sshll.u32 %s4, 4
      %s1668 = int_to_ptr.hbm [resolvable:$true] %s1667
      %1670 = dma.vmem_to_hbm [thread:$0]  %s1666, 128, %s1668, [#allocation7]
    $region29: #{tpu_custom_call.1} parent=1 // pred_fallthru
      _
    // Predicated region
    $region30: #{tpu_custom_call.1} parent=1 // pred_check
      _
    $region31: #{tpu_custom_call.1} parent=1 // pred_check_branch
      %1672 = sbr.rel (0) target = $region33
    $region32: #{tpu_custom_call.1} parent=1 // pred_region
      %1674 = dma.done [#allocation4], 6144
    $region33: #{tpu_custom_call.1} parent=1 // pred_fallthru
      _
    // Predicated region
    $region34: #{tpu_custom_call.1} parent=1 // pred_check
      _
    $region35: #{tpu_custom_call.1} parent=1 // pred_check_branch
      %1676 = sbr.rel (0) target = $region37
    $region36: #{tpu_custom_call.1} parent=1 // pred_region
      %1678 = dma.done [#allocation7], 128
    $region37: #{tpu_custom_call.1} parent=1 // pred_fallthru
      _
    %1679 = vsyncpa [#allocation3], 1
    %1680 = vsyncpa [#allocation4], 1
    %1681 = vsyncpa [#allocation7], 1

</llo_original>
